<compile_context>
chip_gen: v7x
topology: tpu7x:2x2x1
jax: 0.10.0
libtpu: 0.0.40
codegen_flags: <defaults>
</compile_context>

<pallas_src>
import jax
import jax.numpy as jnp
from jax.experimental import pallas as pl
from jax.experimental.pallas import tpu as pltpu

N_EMBD = 256
FFN_HIDDEN = 4 * N_EMBD  # 1024
DROPOUT = 0.2            # identity at inference


def feedforward_kernel(x_ref, w1_ref, b1_ref, w2_ref, b2_ref, o_ref):
    x = x_ref[...]                                                   # (TM, C) bf16
    h = jnp.dot(x, w1_ref[...], preferred_element_type=jnp.float32)  # (TM, 4C) f32
    h = jnp.maximum(h + b1_ref[...], 0.0)
    y = jnp.dot(h.astype(jnp.bfloat16), w2_ref[...],
                preferred_element_type=jnp.float32) + b2_ref[...]    # (TM, C) f32
    # TODO(synk): nn.Dropout(0.2) skipped (inference-mode identity).
    o_ref[...] = y.astype(o_ref.dtype)


def _pick_row_tile(m):
    # Prefer a tall M tile (fills the MXU streaming dimension), but keep the
    # parallel grid extent >= 2 so both v7x TensorCores get work.
    for tm in (512, 256, 128, 64, 32, 16, 8):
        if m % tm == 0 and m // tm >= 2:
            return tm
    for tm in (256, 128, 64, 32, 16, 8):
        if m % tm == 0:
            return tm
    return m


def feedforward(x, params):
    """x: (..., N_EMBD) float32 -> (..., N_EMBD) float32."""
    orig_shape = x.shape
    assert orig_shape[-1] == N_EMBD
    m = 1
    for d in orig_shape[:-1]:
        m *= d
    x2 = x.reshape(m, N_EMBD)

    tm = _pick_row_tile(m)
    m_pad = ((m + tm - 1) // tm) * tm
    if m_pad != m:
        x2 = jnp.pad(x2, ((0, m_pad - m), (0, 0)))

    # bf16 matmul operands; biases stay f32 (added to the f32 accumulator).
    x_bf = x2.astype(jnp.bfloat16)
    w1 = params["w1"].astype(jnp.bfloat16)
    w2 = params["w2"].astype(jnp.bfloat16)
    b1 = params["b1"].astype(jnp.float32)
    b2 = params["b2"].astype(jnp.float32)

    def weight_spec(arr):
        nd = arr.ndim
        return pl.BlockSpec(arr.shape, lambda i, _nd=nd: (0,) * _nd)

    out = pl.pallas_call(
        feedforward_kernel,
        out_shape=jax.ShapeDtypeStruct((m_pad, N_EMBD), jnp.float32),
        grid_spec=pltpu.PrefetchScalarGridSpec(
            num_scalar_prefetch=0,
            grid=(m_pad // tm,),
            in_specs=[
                pl.BlockSpec((tm, N_EMBD), lambda i: (i, 0)),
                weight_spec(w1),
                weight_spec(b1),
                weight_spec(w2),
                weight_spec(b2),
            ],
            out_specs=pl.BlockSpec((tm, N_EMBD), lambda i: (i, 0)),
        ),
        compiler_params=pltpu.CompilerParams(
            dimension_semantics=("parallel",),
            vmem_limit_bytes=32 * 1024 * 1024,
        ),
    )(x_bf, w1, b1, w2, b2)

    if m_pad != m:
        out = out[:m]
    return out.reshape(orig_shape)


def init_params(key):
    """Deterministic synthetic weights. Linear weights stored as (in, out)."""
    ks = jax.random.split(key, 4)
    s = 0.02
    n = lambda k, shape: (s * jax.random.normal(k, shape)).astype(jnp.float32)
    return {
        "w1": n(ks[0], (N_EMBD, FFN_HIDDEN)),
        "b1": n(ks[1], (1, FFN_HIDDEN)),
        "w2": n(ks[2], (FFN_HIDDEN, N_EMBD)),
        "b2": n(ks[3], (1, N_EMBD)),
    }


def reference_feedforward(x, p):
    """Pure-JAX f32 reference mirroring the PyTorch forward (eval mode)."""
    h = jnp.maximum(x @ p["w1"] + p["b1"][0], 0.0)
    return h @ p["w2"] + p["b2"][0]


if __name__ == "__main__":
    key = jax.random.PRNGKey(0)
    kx, kp = jax.random.split(key)

    B, T = 2, 128                         # small (B, T, n_embd) activation
    x = jax.random.normal(kx, (B, T, N_EMBD), jnp.float32)
    params = init_params(kp)

    out = feedforward(x, params)
    out = jax.block_until_ready(out)

    ref = reference_feedforward(x, params)
    assert out.shape == (B, T, N_EMBD)
    # bf16 matmul operands vs. f32 reference -> loosened tolerance (per review).
    assert jnp.allclose(out, ref, atol=2e-2, rtol=2e-2), "mismatch vs reference"

    print("KERNEL_OK")
</pallas_src>

<mosaic_0001>
module attributes {stable_mosaic.version = 11 : i64} {
  func.func @feedforward_kernel(%arg0: i32, %arg1: memref<128x256xbf16, #tpu.memory_space<vmem>>, %arg2: memref<256x1024xbf16, #tpu.memory_space<vmem>>, %arg3: memref<1x1024xf32, #tpu.memory_space<vmem>>, %arg4: memref<1024x256xbf16, #tpu.memory_space<vmem>>, %arg5: memref<1x256xf32, #tpu.memory_space<vmem>>, %arg6: memref<128x256xf32, #tpu.memory_space<vmem>>) attributes {dimension_semantics = [#tpu.dimension_semantics<parallel>], iteration_bounds = array<i64: 2>, scalar_prefetch = 0 : i64, scratch_operands = 0 : i64, tpu.core_type = #tpu.core_type<tc>, window_params = [{transform_indices = @transform_0, window_bounds = array<i64: 128, 256>}, {pipeline_mode = #tpu.pipeline_mode<synchronous>, transform_indices = @transform_1, window_bounds = array<i64: 256, 1024>}, {pipeline_mode = #tpu.pipeline_mode<synchronous>, transform_indices = @transform_2, window_bounds = array<i64: 1, 1024>}, {pipeline_mode = #tpu.pipeline_mode<synchronous>, transform_indices = @transform_3, window_bounds = array<i64: 1024, 256>}, {pipeline_mode = #tpu.pipeline_mode<synchronous>, transform_indices = @transform_4, window_bounds = array<i64: 1, 256>}, {transform_indices = @transform_5, window_bounds = array<i64: 128, 256>}]} {
    %c0 = arith.constant 0 : index
    %c0_0 = arith.constant 0 : index
    %0 = vector.load %arg1[%c0, %c0_0] : memref<128x256xbf16, #tpu.memory_space<vmem>>, vector<128x256xbf16>
    %c0_1 = arith.constant 0 : index
    %c0_2 = arith.constant 0 : index
    %1 = vector.load %arg2[%c0_1, %c0_2] : memref<256x1024xbf16, #tpu.memory_space<vmem>>, vector<256x1024xbf16>
    %cst = arith.constant dense<0.000000e+00> : vector<128x1024xf32>
    %2 = tpu.matmul %0, %1, %cst {dimension_numbers = #tpu.dot_dimension_numbers<[1], [0], [0], [1], [0, 0, 1, 1], [], []>} : vector<128x256xbf16>, vector<256x1024xbf16>, vector<128x1024xf32> -> vector<128x1024xf32>
    %c0_3 = arith.constant 0 : index
    %c0_4 = arith.constant 0 : index
    %3 = vector.load %arg3[%c0_3, %c0_4] : memref<1x1024xf32, #tpu.memory_space<vmem>>, vector<1x1024xf32>
    %4 = vector.broadcast %3 : vector<1x1024xf32> to vector<128x1024xf32>
    %5 = arith.addf %2, %4 : vector<128x1024xf32>
    %cst_5 = arith.constant 0.000000e+00 : f32
    %6 = vector.broadcast %cst_5 : f32 to vector<128x1024xf32>
    %7 = arith.maximumf %5, %6 : vector<128x1024xf32>
    %8 = arith.truncf %7 : vector<128x1024xf32> to vector<128x1024xbf16>
    %c0_6 = arith.constant 0 : index
    %c0_7 = arith.constant 0 : index
    %9 = vector.load %arg4[%c0_6, %c0_7] : memref<1024x256xbf16, #tpu.memory_space<vmem>>, vector<1024x256xbf16>
    %cst_8 = arith.constant dense<0.000000e+00> : vector<128x256xf32>
    %10 = tpu.matmul %8, %9, %cst_8 {dimension_numbers = #tpu.dot_dimension_numbers<[1], [0], [0], [1], [0, 0, 1, 1], [], []>} : vector<128x1024xbf16>, vector<1024x256xbf16>, vector<128x256xf32> -> vector<128x256xf32>
    %c0_9 = arith.constant 0 : index
    %c0_10 = arith.constant 0 : index
    %11 = vector.load %arg5[%c0_9, %c0_10] : memref<1x256xf32, #tpu.memory_space<vmem>>, vector<1x256xf32>
    %12 = vector.broadcast %11 : vector<1x256xf32> to vector<128x256xf32>
    %13 = arith.addf %10, %12 : vector<128x256xf32>
    %c0_11 = arith.constant 0 : index
    %c0_12 = arith.constant 0 : index
    %14 = vector.load %arg6[%c0_11, %c0_12] : memref<128x256xf32, #tpu.memory_space<vmem>>, vector<128x256xf32>
    tpu.vector_store %arg6[%c0_11, %c0_12], %13 {strides = array<i32>} : memref<128x256xf32, #tpu.memory_space<vmem>>, vector<128x256xf32>,
    return
  }
  func.func @transform_0(%arg0: i32) -> (i32, i32) {
    %c0_i32 = arith.constant 0 : i32
    %c0_i32_0 = arith.constant 0 : i32
    return %arg0, %c0_i32 : i32, i32
  }
  func.func @transform_1(%arg0: i32) -> (i32, i32) {
    %c0_i32 = arith.constant 0 : i32
    %c0_i32_0 = arith.constant 0 : i32
    %c0_i32_1 = arith.constant 0 : i32
    return %c0_i32, %c0_i32_0 : i32, i32
  }
  func.func @transform_2(%arg0: i32) -> (i32, i32) {
    %c0_i32 = arith.constant 0 : i32
    %c0_i32_0 = arith.constant 0 : i32
    %c0_i32_1 = arith.constant 0 : i32
    return %c0_i32, %c0_i32_0 : i32, i32
  }
  func.func @transform_3(%arg0: i32) -> (i32, i32) {
    %c0_i32 = arith.constant 0 : i32
    %c0_i32_0 = arith.constant 0 : i32
    %c0_i32_1 = arith.constant 0 : i32
    return %c0_i32, %c0_i32_0 : i32, i32
  }
  func.func @transform_4(%arg0: i32) -> (i32, i32) {
    %c0_i32 = arith.constant 0 : i32
    %c0_i32_0 = arith.constant 0 : i32
    %c0_i32_1 = arith.constant 0 : i32
    return %c0_i32, %c0_i32_0 : i32, i32
  }
  func.func @transform_5(%arg0: i32) -> (i32, i32) {
    %c0_i32 = arith.constant 0 : i32
    %c0_i32_0 = arith.constant 0 : i32
    return %arg0, %c0_i32 : i32, i32
  }
}

</mosaic_0001>

<llo_original>
// kernel: tpu_custom_call.1
$region0: #{tpu_custom_call.1}
  #allocation0 [shape = 'u32[]', space=smem, size = 0x4, offset = 0x4, fixed_abs, tag = 'smem constant byte address 0x4 - core index']
  #allocation1 [shape = 'u32[144,128]{1,0:T(1,128)}', space=vmem, size = 0x12000, scoped, tag = 'internal scratch']
  %s0 = inlined_call_operand.hbm [shape: bf16[256,256], index: 0, kind: input, shape index: {}]
  %s1 = inlined_call_operand.hbm [shape: bf16[256,1024], index: 1, kind: input, shape index: {}]
  %s2 = inlined_call_operand.hbm [shape: f32[1,1024], index: 2, kind: input, shape index: {}]
  %s3 = inlined_call_operand.hbm [shape: bf16[1024,256], index: 3, kind: input, shape index: {}]
  %s4 = inlined_call_operand.vmem [shape: f32[1,256], index: 4, kind: input, shape index: {}]
  %s5 = inlined_call_operand.hbm [shape: f32[256,256], index: 5, kind: output, shape index: {}]
  %s6 = sld [smem:[#allocation0]]
  $region69: #{tpu_custom_call.1} parent=0
    _
  %s8 = ssub.s32 1, %s6
  %s9 = scalar_select 0, %s8, %s6
  $region1: #{tpu_custom_call.1} parent=0
    #allocation2 [shape = 'u8[131072]{0}', space=vmem, size = 0x20000, scoped, tag = 'input window, operand 0']
    #allocation3 [shape = 's32[2]{0}', space=sflag, size = 0x8, scoped, tag = 'scoped memory for tpu_custom_call.1']
    #allocation4 [shape = 's32[2]{0}', space=sflag, size = 0x8, scoped, tag = 'scoped memory for tpu_custom_call.1']
    #allocation5 [shape = 'u8[524288]{0}', space=vmem, size = 0x80000, scoped, tag = 'input window, operand 1, single buffered']
    #allocation6 [shape = 's32[1]{0}', space=sflag, size = 0x4, scoped, tag = 'scoped memory for tpu_custom_call.1']
    #allocation7 [shape = 'u8[4096]{0}', space=vmem, size = 0x1000, scoped, tag = 'input window, operand 2, single buffered']
    #allocation8 [shape = 'u8[524288]{0}', space=vmem, size = 0x80000, scoped, tag = 'input window, operand 3, single buffered']
    #allocation9 [shape = 's32[1]{0}', space=sflag, size = 0x4, scoped, tag = 'scoped memory for tpu_custom_call.1']
    #allocation10 [shape = 'u8[262144]{0}', space=vmem, size = 0x40000, scoped, tag = 'output window, operand 0']
    %10 = vsyncpa [#allocation3], 0
    %s11 = scalar_lea.sflag [#allocation3], 1
    %12 = vsyncpa %s11, 0
    %13 = vsyncpa [#allocation6], 0
    %14 = vsyncpa [#allocation9], 0
    %15 = vsyncpa [#allocation4], 0
    %s16 = scalar_lea.sflag [#allocation4], 1
    %17 = vsyncpa %s16, 0
    loop: start=0, step=1, limit=4
    $region2: #{tpu_custom_call.1} parent=1 // loop_pre_header
      _
    $region3: #{tpu_custom_call.1} parent=1 // loop_header
      %s19 = sphi 0, %s23
      %p20 = scmp.ge.s32.totalorder %s19, 4
      %s29 = sphi 0, %s31
      %s32 = sphi 0, %s29
      %s33 = sphi 0, %s32
      %s49 = sphi 0, %s33
      %s53 = sphi 0, %s53
      %s55 = sphi 0, %s53
      %s56 = sphi 0, %s55
      %s70 = sphi 0, %s56
      %s74 = sphi 0, %s74
      %s76 = sphi 0, %s74
      %s77 = sphi 0, %s76
      %s91 = sphi 0, %s77
      %s95 = sphi 0, %s95
      %s97 = sphi 0, %s95
      %s98 = sphi 0, %s97
      %s112 = sphi 0, %s98
      %s116 = sphi 0, %s116
      %s118 = sphi 0, %s116
      %s119 = sphi 0, %s118
      %s133 = sphi 0, %s119
      %s139 = sphi 0, %s141
      %s142 = sphi 0, %s139
      %s143 = sphi 0, %s142
      %s159 = sphi 0, %s143
    $region4: #{tpu_custom_call.1} parent=1 // loop_header_branch
      %22 = sbr.rel (%p20) target = $region8
    $region5: #{tpu_custom_call.1} parent=1 // loop_body
      %s24 = ssub.s32 %s19, 1
      %s25 = ssub.s32 %s19, 2
      %s26 = sadd.s32 %s19, 1
      %s27 = ssub.s32 %s19, %s26
      %p28 = scmp.eq.s32.totalorder %s27, 0
      %s30 = sadd.s32 %s29, 1
      %s31 = scalar_select %p28, %s29, %s30
      %p34 = pneg %p28
      %p35 = scmp.eq.s32.totalorder %s19, 1
      %p36 = por %p34, %p35
      %p37 = scmp.ne.s32.totalorder %s29, %s32
      %p38 = scmp.eq.s32.totalorder %s19, 0
      %p39 = por %p37, %p38
      %p40 = scmp.ne.s32.totalorder %s29, %s32
      %p41 = scmp.eq.s32.totalorder %s24, 1
      %p42 = por %p40, %p41
      %p43 = scmp.ne.s32.totalorder %s32, %s33
      %p44 = scmp.eq.s32.totalorder %s24, 0
      %p45 = por %p43, %p44
      %p46 = scmp.ne.s32.totalorder %s32, %s33
      %p47 = scmp.eq.s32.totalorder %s25, 1
      %p48 = por %p46, %p47
      %p50 = scmp.ne.s32.totalorder %s33, %s49
      %p51 = scmp.eq.s32.totalorder %s25, 0
      %p52 = por %p50, %p51
      %s54 = sadd.s32 %s53, 1
      %p57 = scmp.eq.s32.totalorder %s19, 1
      %p58 = scmp.ne.s32.totalorder %s53, %s55
      %p59 = scmp.eq.s32.totalorder %s19, 0
      %p60 = por %p58, %p59
      %p61 = scmp.ne.s32.totalorder %s53, %s55
      %p62 = scmp.eq.s32.totalorder %s24, 1
      %p63 = por %p61, %p62
      %p64 = scmp.ne.s32.totalorder %s55, %s56
      %p65 = scmp.eq.s32.totalorder %s24, 0
      %p66 = por %p64, %p65
      %p67 = scmp.ne.s32.totalorder %s55, %s56
      %p68 = scmp.eq.s32.totalorder %s25, 1
      %p69 = por %p67, %p68
      %p71 = scmp.ne.s32.totalorder %s56, %s70
      %p72 = scmp.eq.s32.totalorder %s25, 0
      %p73 = por %p71, %p72
      %s75 = sadd.s32 %s74, 1
      %p78 = scmp.eq.s32.totalorder %s19, 1
      %p79 = scmp.ne.s32.totalorder %s74, %s76
      %p80 = scmp.eq.s32.totalorder %s19, 0
      %p81 = por %p79, %p80
      %p82 = scmp.ne.s32.totalorder %s74, %s76
      %p83 = scmp.eq.s32.totalorder %s24, 1
      %p84 = por %p82, %p83
      %p85 = scmp.ne.s32.totalorder %s76, %s77
      %p86 = scmp.eq.s32.totalorder %s24, 0
      %p87 = por %p85, %p86
      %p88 = scmp.ne.s32.totalorder %s76, %s77
      %p89 = scmp.eq.s32.totalorder %s25, 1
      %p90 = por %p88, %p89
      %p92 = scmp.ne.s32.totalorder %s77, %s91
      %p93 = scmp.eq.s32.totalorder %s25, 0
      %p94 = por %p92, %p93
      %s96 = sadd.s32 %s95, 1
      %p99 = scmp.eq.s32.totalorder %s19, 1
      %p100 = scmp.ne.s32.totalorder %s95, %s97
      %p101 = scmp.eq.s32.totalorder %s19, 0
      %p102 = por %p100, %p101
      %p103 = scmp.ne.s32.totalorder %s95, %s97
      %p104 = scmp.eq.s32.totalorder %s24, 1
      %p105 = por %p103, %p104
      %p106 = scmp.ne.s32.totalorder %s97, %s98
      %p107 = scmp.eq.s32.totalorder %s24, 0
      %p108 = por %p106, %p107
      %p109 = scmp.ne.s32.totalorder %s97, %s98
      %p110 = scmp.eq.s32.totalorder %s25, 1
      %p111 = por %p109, %p110
      %p113 = scmp.ne.s32.totalorder %s98, %s112
      %p114 = scmp.eq.s32.totalorder %s25, 0
      %p115 = por %p113, %p114
      %s117 = sadd.s32 %s116, 1
      %p120 = scmp.eq.s32.totalorder %s19, 1
      %p121 = scmp.ne.s32.totalorder %s116, %s118
      %p122 = scmp.eq.s32.totalorder %s19, 0
      %p123 = por %p121, %p122
      %p124 = scmp.ne.s32.totalorder %s116, %s118
      %p125 = scmp.eq.s32.totalorder %s24, 1
      %p126 = por %p124, %p125
      %p127 = scmp.ne.s32.totalorder %s118, %s119
      %p128 = scmp.eq.s32.totalorder %s24, 0
      %p129 = por %p127, %p128
      %p130 = scmp.ne.s32.totalorder %s118, %s119
      %p131 = scmp.eq.s32.totalorder %s25, 1
      %p132 = por %p130, %p131
      %p134 = scmp.ne.s32.totalorder %s119, %s133
      %p135 = scmp.eq.s32.totalorder %s25, 0
      %p136 = por %p134, %p135
      %s137 = ssub.s32 %s19, %s26
      %p138 = scmp.eq.s32.totalorder %s137, 0
      %s140 = sadd.s32 %s139, 1
      %s141 = scalar_select %p138, %s139, %s140
      %p144 = pneg %p138
      %p145 = scmp.eq.s32.totalorder %s19, 1
      %p146 = por %p144, %p145
      %p147 = scmp.ne.s32.totalorder %s139, %s142
      %p148 = scmp.eq.s32.totalorder %s19, 0
      %p149 = por %p147, %p148
      %p150 = scmp.ne.s32.totalorder %s139, %s142
      %p151 = scmp.eq.s32.totalorder %s24, 1
      %p152 = por %p150, %p151
      %p153 = scmp.ne.s32.totalorder %s142, %s143
      %p154 = scmp.eq.s32.totalorder %s24, 0
      %p155 = por %p153, %p154
      %p156 = scmp.ne.s32.totalorder %s142, %s143
      %p157 = scmp.eq.s32.totalorder %s25, 1
      %p158 = por %p156, %p157
      %p160 = scmp.ne.s32.totalorder %s143, %s159
      %p161 = scmp.eq.s32.totalorder %s25, 0
      %p162 = por %p160, %p161
      %p163 = scmp.le.s32.totalorder 1, %s19
      %p164 = scmp.lt.s32.totalorder %s19, 3
      %p165 = pnand %p163, %p164
      %p166 = pneg %p165
      // Predicated region
      $region9: #{tpu_custom_call.1} parent=5 // pred_check
        _
      $region10: #{tpu_custom_call.1} parent=5 // pred_check_branch
        %168 = sbr.rel (%p165) target = $region12
      $region11: #{tpu_custom_call.1} parent=5 // pred_region
        %s169 = ssub.s32 %s19, 1
        // Predicated region
        $region13: #{tpu_custom_call.1} parent=11 // pred_check
          %p170 = pneg %p66
        $region14: #{tpu_custom_call.1} parent=11 // pred_check_branch
          %172 = sbr.rel (%p170) target = $region16
        $region15: #{tpu_custom_call.1} parent=11 // pred_region
          %s174 = ssub.s32 16384, 16384
          %175 = vsyncadd [#allocation6], %s174
          %s176 = sshll.u32 [#allocation5], 4
          %s177 = int_to_ptr.vmem [resolvable:$true] %s176
          %182 = dma.hbm_to_vmem [thread:$0]  %s1, 16384, %s177, [#allocation6], 512, 512, 32
        $region16: #{tpu_custom_call.1} parent=11 // pred_fallthru
          _
        // Predicated region
        $region17: #{tpu_custom_call.1} parent=11 // pred_check
          %p183 = pneg %p87
        $region18: #{tpu_custom_call.1} parent=11 // pred_check_branch
          %185 = sbr.rel (%p183) target = $region20
        $region19: #{tpu_custom_call.1} parent=11 // pred_region
          %s187 = ssub.s32 128, 128
          %188 = vsyncadd [#allocation6], %s187
          %s190 = sshll.u32 [#allocation7], 4
          %s191 = int_to_ptr.vmem [resolvable:$true] %s190
          %193 = dma.hbm_to_vmem [thread:$0]  %s2, 128, %s191, [#allocation6]
        $region20: #{tpu_custom_call.1} parent=11 // pred_fallthru
          _
        // Predicated region
        $region21: #{tpu_custom_call.1} parent=11 // pred_check
          %p194 = pneg %p108
        $region22: #{tpu_custom_call.1} parent=11 // pred_check_branch
          %196 = sbr.rel (%p194) target = $region24
        $region23: #{tpu_custom_call.1} parent=11 // pred_region
          %s198 = ssub.s32 16384, 16384
          %199 = vsyncadd [#allocation9], %s198
          %s200 = sshll.u32 [#allocation8], 4
          %s201 = int_to_ptr.vmem [resolvable:$true] %s200
          %206 = dma.hbm_to_vmem [thread:$0]  %s3, 16384, %s201, [#allocation9], 128, 128, 8
        $region24: #{tpu_custom_call.1} parent=11 // pred_fallthru
          _
        // Predicated region
        $region25: #{tpu_custom_call.1} parent=11 // pred_check
          %p207 = pneg %p129
        $region26: #{tpu_custom_call.1} parent=11 // pred_check_branch
          %209 = sbr.rel (%p207) target = $region28
        $region27: #{tpu_custom_call.1} parent=11 // pred_region
          _
        $region28: #{tpu_custom_call.1} parent=11 // pred_fallthru
          _
      $region12: #{tpu_custom_call.1} parent=5 // pred_fallthru
        _
      %p210 = scmp.lt.s32.totalorder %s19, 2
      // Predicated region
      $region29: #{tpu_custom_call.1} parent=5 // pred_check
        %p211 = pneg %p210
      $region30: #{tpu_custom_call.1} parent=5 // pred_check_branch
        %213 = sbr.rel (%p211) target = $region32
      $region31: #{tpu_custom_call.1} parent=5 // pred_region
        // Predicated region
        $region33: #{tpu_custom_call.1} parent=31 // pred_check
          %p214 = pneg %p39
        $region34: #{tpu_custom_call.1} parent=31 // pred_check_branch
          %216 = sbr.rel (%p214) target = $region36
        $region35: #{tpu_custom_call.1} parent=31 // pred_region
          %s217 = sand.u32 %s29, 1
          %s218 = scalar_lea.sflag [#allocation3], %s217
          %s219 = sand.u32 %s29, 1
          %s220 = smul.addr %s219, 128
          %s221 = scalar_lea.vmem [#allocation2], %s220
          %s222 = smul.u32 16, %s19
          %s224 = ssub.s32 2048, 2048
          %225 = vsyncadd %s218, %s224
          %s226 = smul.addr %s222, 2
          %s227 = smul.addr %s226, 64
          %s228 = scalar_lea.hbm %s0, %s227
          %s229 = sshll.u32 %s221, 4
          %s230 = int_to_ptr.vmem [resolvable:$true] %s229
          %235 = dma.hbm_to_vmem [thread:$0]  %s228, 2048, %s230, %s218, 128, 128, 8
        $region36: #{tpu_custom_call.1} parent=31 // pred_fallthru
          _
      $region32: #{tpu_custom_call.1} parent=5 // pred_fallthru
        _
      %p236 = scmp.le.s32.totalorder 1, %s19
      %p237 = scmp.lt.s32.totalorder %s19, 3
      %p238 = pnand %p236, %p237
      %p239 = pneg %p238
      // Predicated region
      $region37: #{tpu_custom_call.1} parent=5 // pred_check
        _
      $region38: #{tpu_custom_call.1} parent=5 // pred_check_branch
        %241 = sbr.rel (%p238) target = $region40
      $region39: #{tpu_custom_call.1} parent=5 // pred_region
        %s242 = ssub.s32 %s19, 1
        %s243 = sand.u32 %s32, 1
        %s244 = scalar_lea.sflag [#allocation3], %s243
        %s245 = sand.u32 %s32, 1
        %s246 = smul.addr %s245, 128
        %s247 = scalar_lea.vmem [#allocation2], %s246
        // Predicated region
        $region41: #{tpu_custom_call.1} parent=39 // pred_check
          %p248 = pneg %p45
        $region42: #{tpu_custom_call.1} parent=39 // pred_check_branch
          %250 = sbr.rel (%p248) target = $region44
        $region43: #{tpu_custom_call.1} parent=39 // pred_region
          %251 = dma.done %s244, 2048
        $region44: #{tpu_custom_call.1} parent=39 // pred_fallthru
          _
        // Predicated region
        $region45: #{tpu_custom_call.1} parent=39 // pred_check
          %p252 = pneg %p66
        $region46: #{tpu_custom_call.1} parent=39 // pred_check_branch
          %254 = sbr.rel (%p252) target = $region48
        $region47: #{tpu_custom_call.1} parent=39 // pred_region
          %255 = dma.done [#allocation6], 16384
        $region48: #{tpu_custom_call.1} parent=39 // pred_fallthru
          _
        // Predicated region
        $region49: #{tpu_custom_call.1} parent=39 // pred_check
          %p256 = pneg %p87
        $region50: #{tpu_custom_call.1} parent=39 // pred_check_branch
          %258 = sbr.rel (%p256) target = $region52
        $region51: #{tpu_custom_call.1} parent=39 // pred_region
          %259 = dma.done [#allocation6], 128
        $region52: #{tpu_custom_call.1} parent=39 // pred_fallthru
          _
        // Predicated region
        $region53: #{tpu_custom_call.1} parent=39 // pred_check
          %p260 = pneg %p108
        $region54: #{tpu_custom_call.1} parent=39 // pred_check_branch
          %262 = sbr.rel (%p260) target = $region56
        $region55: #{tpu_custom_call.1} parent=39 // pred_region
          %263 = dma.done [#allocation9], 16384
        $region56: #{tpu_custom_call.1} parent=39 // pred_fallthru
          _
        %s264 = sand.u32 %s32, 1
        %s265 = scalar_lea.sflag [#allocation3], %s264
        %s266 = sand.u32 %s32, 1
        %s267 = smul.addr %s266, 128
        %s268 = scalar_lea.vmem [#allocation2], %s267
        %p269 = pneg %p45
        %p270 = pneg %p42
        %p271 = pneg %p66
        %p272 = pneg %p63
        %p273 = pneg %p87
        %p274 = pneg %p84
        %p275 = pneg %p108
        %p276 = pneg %p105
        %p277 = pneg %p129
        %p278 = pneg %p126
        %p279 = pneg %p155
        %p280 = pneg %p152
        %s281 = sand.u32 %s142, 1
        %s282 = scalar_lea.sflag [#allocation4], %s281
        %s283 = sand.u32 %s142, 1
        %s284 = smul.addr %s283, 256
        %s285 = scalar_lea.vmem [#allocation10], %s284
        %s286 = smul.u32 16, %s24
        %s287 = smul.u32 16, %s24
        %v288 = vld [vmem:[%s247] sm:$0xff]
        %v289 = vld [vmem:[%s247 + $0x8] sm:$0xff]
        %v290 = vld [vmem:[%s247 + $0x10] sm:$0xff]
        %v291 = vld [vmem:[%s247 + $0x18] sm:$0xff]
        %v292 = vld [vmem:[%s247 + $0x20] sm:$0xff]
        %v293 = vld [vmem:[%s247 + $0x28] sm:$0xff]
        %v294 = vld [vmem:[%s247 + $0x30] sm:$0xff]
        %v295 = vld [vmem:[%s247 + $0x38] sm:$0xff]
        %v296 = vld [vmem:[%s247 + $0x40] sm:$0xff]
        %v297 = vld [vmem:[%s247 + $0x48] sm:$0xff]
        %v298 = vld [vmem:[%s247 + $0x50] sm:$0xff]
        %v299 = vld [vmem:[%s247 + $0x58] sm:$0xff]
        %v300 = vld [vmem:[%s247 + $0x60] sm:$0xff]
        %v301 = vld [vmem:[%s247 + $0x68] sm:$0xff]
        %v302 = vld [vmem:[%s247 + $0x70] sm:$0xff]
        %v303 = vld [vmem:[%s247 + $0x78] sm:$0xff]
        %v304 = vld [vmem:[#allocation5] sm:$0xff]
        %v305 = vld [vmem:[#allocation5 + $0x8] sm:$0xff]
        %v306 = vld [vmem:[#allocation5 + $0x10] sm:$0xff]
        %v307 = vld [vmem:[#allocation5 + $0x18] sm:$0xff]
        %v308 = vld [vmem:[#allocation5 + $0x20] sm:$0xff]
        %v309 = vld [vmem:[#allocation5 + $0x28] sm:$0xff]
        %v310 = vld [vmem:[#allocation5 + $0x30] sm:$0xff]
        %v311 = vld [vmem:[#allocation5 + $0x38] sm:$0xff]
        %v312 = vld [vmem:[#allocation5 + $0x40] sm:$0xff]
        %v313 = vld [vmem:[#allocation5 + $0x48] sm:$0xff]
        %v314 = vld [vmem:[#allocation5 + $0x50] sm:$0xff]
        %v315 = vld [vmem:[#allocation5 + $0x58] sm:$0xff]
        %v316 = vld [vmem:[#allocation5 + $0x60] sm:$0xff]
        %v317 = vld [vmem:[#allocation5 + $0x68] sm:$0xff]
        %v318 = vld [vmem:[#allocation5 + $0x70] sm:$0xff]
        %v319 = vld [vmem:[#allocation5 + $0x78] sm:$0xff]
        %v320 = vld [vmem:[#allocation5 + $0x80] sm:$0xff]
        %v321 = vld [vmem:[#allocation5 + $0x88] sm:$0xff]
        %v322 = vld [vmem:[#allocation5 + $0x90] sm:$0xff]
        %v323 = vld [vmem:[#allocation5 + $0x98] sm:$0xff]
        %v324 = vld [vmem:[#allocation5 + $0xa0] sm:$0xff]
        %v325 = vld [vmem:[#allocation5 + $0xa8] sm:$0xff]
        %v326 = vld [vmem:[#allocation5 + $0xb0] sm:$0xff]
        %v327 = vld [vmem:[#allocation5 + $0xb8] sm:$0xff]
        %v328 = vld [vmem:[#allocation5 + $0xc0] sm:$0xff]
        %v329 = vld [vmem:[#allocation5 + $0xc8] sm:$0xff]
        %v330 = vld [vmem:[#allocation5 + $0xd0] sm:$0xff]
        %v331 = vld [vmem:[#allocation5 + $0xd8] sm:$0xff]
        %v332 = vld [vmem:[#allocation5 + $0xe0] sm:$0xff]
        %v333 = vld [vmem:[#allocation5 + $0xe8] sm:$0xff]
        %v334 = vld [vmem:[#allocation5 + $0xf0] sm:$0xff]
        %v335 = vld [vmem:[#allocation5 + $0xf8] sm:$0xff]
        %v336 = vld [vmem:[#allocation5 + $0x100] sm:$0xff]
        %v337 = vld [vmem:[#allocation5 + $0x108] sm:$0xff]
        %v338 = vld [vmem:[#allocation5 + $0x110] sm:$0xff]
        %v339 = vld [vmem:[#allocation5 + $0x118] sm:$0xff]
        %v340 = vld [vmem:[#allocation5 + $0x120] sm:$0xff]
        %v341 = vld [vmem:[#allocation5 + $0x128] sm:$0xff]
        %v342 = vld [vmem:[#allocation5 + $0x130] sm:$0xff]
        %v343 = vld [vmem:[#allocation5 + $0x138] sm:$0xff]
        %v344 = vld [vmem:[#allocation5 + $0x140] sm:$0xff]
        %v345 = vld [vmem:[#allocation5 + $0x148] sm:$0xff]
        %v346 = vld [vmem:[#allocation5 + $0x150] sm:$0xff]
        %v347 = vld [vmem:[#allocation5 + $0x158] sm:$0xff]
        %v348 = vld [vmem:[#allocation5 + $0x160] sm:$0xff]
        %v349 = vld [vmem:[#allocation5 + $0x168] sm:$0xff]
        %v350 = vld [vmem:[#allocation5 + $0x170] sm:$0xff]
        %v351 = vld [vmem:[#allocation5 + $0x178] sm:$0xff]
        %v352 = vld [vmem:[#allocation5 + $0x180] sm:$0xff]
        %v353 = vld [vmem:[#allocation5 + $0x188] sm:$0xff]
        %v354 = vld [vmem:[#allocation5 + $0x190] sm:$0xff]
        %v355 = vld [vmem:[#allocation5 + $0x198] sm:$0xff]
        %v356 = vld [vmem:[#allocation5 + $0x1a0] sm:$0xff]
        %v357 = vld [vmem:[#allocation5 + $0x1a8] sm:$0xff]
        %v358 = vld [vmem:[#allocation5 + $0x1b0] sm:$0xff]
        %v359 = vld [vmem:[#allocation5 + $0x1b8] sm:$0xff]
        %v360 = vld [vmem:[#allocation5 + $0x1c0] sm:$0xff]
        %v361 = vld [vmem:[#allocation5 + $0x1c8] sm:$0xff]
        %v362 = vld [vmem:[#allocation5 + $0x1d0] sm:$0xff]
        %v363 = vld [vmem:[#allocation5 + $0x1d8] sm:$0xff]
        %v364 = vld [vmem:[#allocation5 + $0x1e0] sm:$0xff]
        %v365 = vld [vmem:[#allocation5 + $0x1e8] sm:$0xff]
        %v366 = vld [vmem:[#allocation5 + $0x1f0] sm:$0xff]
        %v367 = vld [vmem:[#allocation5 + $0x1f8] sm:$0xff]
        %v368 = vld [vmem:[#allocation5 + $0x200] sm:$0xff]
        %v369 = vld [vmem:[#allocation5 + $0x208] sm:$0xff]
        %v370 = vld [vmem:[#allocation5 + $0x210] sm:$0xff]
        %v371 = vld [vmem:[#allocation5 + $0x218] sm:$0xff]
        %v372 = vld [vmem:[#allocation5 + $0x220] sm:$0xff]
        %v373 = vld [vmem:[#allocation5 + $0x228] sm:$0xff]
        %v374 = vld [vmem:[#allocation5 + $0x230] sm:$0xff]
        %v375 = vld [vmem:[#allocation5 + $0x238] sm:$0xff]
        %v376 = vld [vmem:[#allocation5 + $0x240] sm:$0xff]
        %v377 = vld [vmem:[#allocation5 + $0x248] sm:$0xff]
        %v378 = vld [vmem:[#allocation5 + $0x250] sm:$0xff]
        %v379 = vld [vmem:[#allocation5 + $0x258] sm:$0xff]
        %v380 = vld [vmem:[#allocation5 + $0x260] sm:$0xff]
        %v381 = vld [vmem:[#allocation5 + $0x268] sm:$0xff]
        %v382 = vld [vmem:[#allocation5 + $0x270] sm:$0xff]
        %v383 = vld [vmem:[#allocation5 + $0x278] sm:$0xff]
        %v384 = vld [vmem:[#allocation5 + $0x280] sm:$0xff]
        %v385 = vld [vmem:[#allocation5 + $0x288] sm:$0xff]
        %v386 = vld [vmem:[#allocation5 + $0x290] sm:$0xff]
        %v387 = vld [vmem:[#allocation5 + $0x298] sm:$0xff]
        %v388 = vld [vmem:[#allocation5 + $0x2a0] sm:$0xff]
        %v389 = vld [vmem:[#allocation5 + $0x2a8] sm:$0xff]
        %v390 = vld [vmem:[#allocation5 + $0x2b0] sm:$0xff]
        %v391 = vld [vmem:[#allocation5 + $0x2b8] sm:$0xff]
        %v392 = vld [vmem:[#allocation5 + $0x2c0] sm:$0xff]
        %v393 = vld [vmem:[#allocation5 + $0x2c8] sm:$0xff]
        %v394 = vld [vmem:[#allocation5 + $0x2d0] sm:$0xff]
        %v395 = vld [vmem:[#allocation5 + $0x2d8] sm:$0xff]
        %v396 = vld [vmem:[#allocation5 + $0x2e0] sm:$0xff]
        %v397 = vld [vmem:[#allocation5 + $0x2e8] sm:$0xff]
        %v398 = vld [vmem:[#allocation5 + $0x2f0] sm:$0xff]
        %v399 = vld [vmem:[#allocation5 + $0x2f8] sm:$0xff]
        %v400 = vld [vmem:[#allocation5 + $0x300] sm:$0xff]
        %v401 = vld [vmem:[#allocation5 + $0x308] sm:$0xff]
        %v402 = vld [vmem:[#allocation5 + $0x310] sm:$0xff]
        %v403 = vld [vmem:[#allocation5 + $0x318] sm:$0xff]
        %v404 = vld [vmem:[#allocation5 + $0x320] sm:$0xff]
        %v405 = vld [vmem:[#allocation5 + $0x328] sm:$0xff]
        %v406 = vld [vmem:[#allocation5 + $0x330] sm:$0xff]
        %v407 = vld [vmem:[#allocation5 + $0x338] sm:$0xff]
        %v408 = vld [vmem:[#allocation5 + $0x340] sm:$0xff]
        %v409 = vld [vmem:[#allocation5 + $0x348] sm:$0xff]
        %v410 = vld [vmem:[#allocation5 + $0x350] sm:$0xff]
        %v411 = vld [vmem:[#allocation5 + $0x358] sm:$0xff]
        %v412 = vld [vmem:[#allocation5 + $0x360] sm:$0xff]
        %v413 = vld [vmem:[#allocation5 + $0x368] sm:$0xff]
        %v414 = vld [vmem:[#allocation5 + $0x370] sm:$0xff]
        %v415 = vld [vmem:[#allocation5 + $0x378] sm:$0xff]
        %v416 = vld [vmem:[#allocation5 + $0x380] sm:$0xff]
        %v417 = vld [vmem:[#allocation5 + $0x388] sm:$0xff]
        %v418 = vld [vmem:[#allocation5 + $0x390] sm:$0xff]
        %v419 = vld [vmem:[#allocation5 + $0x398] sm:$0xff]
        %v420 = vld [vmem:[#allocation5 + $0x3a0] sm:$0xff]
        %v421 = vld [vmem:[#allocation5 + $0x3a8] sm:$0xff]
        %v422 = vld [vmem:[#allocation5 + $0x3b0] sm:$0xff]
        %v423 = vld [vmem:[#allocation5 + $0x3b8] sm:$0xff]
        %v424 = vld [vmem:[#allocation5 + $0x3c0] sm:$0xff]
        %v425 = vld [vmem:[#allocation5 + $0x3c8] sm:$0xff]
        %v426 = vld [vmem:[#allocation5 + $0x3d0] sm:$0xff]
        %v427 = vld [vmem:[#allocation5 + $0x3d8] sm:$0xff]
        %v428 = vld [vmem:[#allocation5 + $0x3e0] sm:$0xff]
        %v429 = vld [vmem:[#allocation5 + $0x3e8] sm:$0xff]
        %v430 = vld [vmem:[#allocation5 + $0x3f0] sm:$0xff]
        %v431 = vld [vmem:[#allocation5 + $0x3f8] sm:$0xff]
        %v432 = vld [vmem:[#allocation7] sm:$0xff]
        %v434 = vlaneseq
        %v435 = vshrl.u32 %v434, 7
        %v436 = vsub.s32 0, %v435
        %v437 = vrot.slane %v432, %v436
        %v438 = vlaneseq
        %v439 = vshrl.u32 %v438, 7
        %v440 = vsub.s32 1, %v439
        %v441 = vrot.slane %v432, %v440
        %v442 = vlaneseq
        %v443 = vshrl.u32 %v442, 7
        %v444 = vsub.s32 2, %v443
        %v445 = vrot.slane %v432, %v444
        %v446 = vlaneseq
        %v447 = vshrl.u32 %v446, 7
        %v448 = vsub.s32 3, %v447
        %v449 = vrot.slane %v432, %v448
        %v450 = vlaneseq
        %v451 = vshrl.u32 %v450, 7
        %v452 = vsub.s32 4, %v451
        %v453 = vrot.slane %v432, %v452
        %v454 = vlaneseq
        %v455 = vshrl.u32 %v454, 7
        %v456 = vsub.s32 5, %v455
        %v457 = vrot.slane %v432, %v456
        %v458 = vlaneseq
        %v459 = vshrl.u32 %v458, 7
        %v460 = vsub.s32 6, %v459
        %v461 = vrot.slane %v432, %v460
        %v462 = vlaneseq
        %v463 = vshrl.u32 %v462, 7
        %v464 = vsub.s32 7, %v463
        %v465 = vrot.slane %v432, %v464
        %v490 = vunpack.c.l.b16 %v288
        %v491 = vunpack.c.h.b16 %v288
        %v492 = vunpack.c.l.b16 %v289
        %v493 = vunpack.c.h.b16 %v289
        %v494 = vunpack.c.l.b16 %v290
        %v495 = vunpack.c.h.b16 %v290
        %v496 = vunpack.c.l.b16 %v291
        %v497 = vunpack.c.h.b16 %v291
        %v498 = vunpack.c.l.b16 %v292
        %v499 = vunpack.c.h.b16 %v292
        %v500 = vunpack.c.l.b16 %v293
        %v501 = vunpack.c.h.b16 %v293
        %v502 = vunpack.c.l.b16 %v294
        %v503 = vunpack.c.h.b16 %v294
        %v504 = vunpack.c.l.b16 %v295
        %v505 = vunpack.c.h.b16 %v295
        %v506 = vunpack.c.l.b16 %v296
        %v507 = vunpack.c.h.b16 %v296
        %v508 = vunpack.c.l.b16 %v297
        %v509 = vunpack.c.h.b16 %v297
        %v510 = vunpack.c.l.b16 %v298
        %v511 = vunpack.c.h.b16 %v298
        %v512 = vunpack.c.l.b16 %v299
        %v513 = vunpack.c.h.b16 %v299
        %v514 = vunpack.c.l.b16 %v300
        %v515 = vunpack.c.h.b16 %v300
        %v516 = vunpack.c.l.b16 %v301
        %v517 = vunpack.c.h.b16 %v301
        %v518 = vunpack.c.l.b16 %v302
        %v519 = vunpack.c.h.b16 %v302
        %v520 = vunpack.c.l.b16 %v303
        %v521 = vunpack.c.h.b16 %v303
        %v522 = vpack.c.b16 %v492, %v490
        %v523 = vpack.c.b16 %v493, %v491
        %v524 = vpack.c.b16 %v496, %v494
        %v525 = vpack.c.b16 %v497, %v495
        %v526 = vpack.c.b16 %v500, %v498
        %v527 = vpack.c.b16 %v501, %v499
        %v528 = vpack.c.b16 %v504, %v502
        %v529 = vpack.c.b16 %v505, %v503
        %v530 = vpack.c.b16 %v508, %v506
        %v531 = vpack.c.b16 %v509, %v507
        %v532 = vpack.c.b16 %v512, %v510
        %v533 = vpack.c.b16 %v513, %v511
        %v534 = vpack.c.b16 %v516, %v514
        %v535 = vpack.c.b16 %v517, %v515
        %v536 = vpack.c.b16 %v520, %v518
        %v537 = vpack.c.b16 %v521, %v519
        %v682 = vunpack.c.l.b16 %v304
        %v683 = vunpack.c.h.b16 %v304
        %v684 = vunpack.c.l.b16 %v305
        %v685 = vunpack.c.h.b16 %v305
        %v686 = vunpack.c.l.b16 %v306
        %v687 = vunpack.c.h.b16 %v306
        %v688 = vunpack.c.l.b16 %v307
        %v689 = vunpack.c.h.b16 %v307
        %v690 = vunpack.c.l.b16 %v308
        %v691 = vunpack.c.h.b16 %v308
        %v692 = vunpack.c.l.b16 %v309
        %v693 = vunpack.c.h.b16 %v309
        %v694 = vunpack.c.l.b16 %v310
        %v695 = vunpack.c.h.b16 %v310
        %v696 = vunpack.c.l.b16 %v311
        %v697 = vunpack.c.h.b16 %v311
        %v698 = vunpack.c.l.b16 %v312
        %v699 = vunpack.c.h.b16 %v312
        %v700 = vunpack.c.l.b16 %v313
        %v701 = vunpack.c.h.b16 %v313
        %v702 = vunpack.c.l.b16 %v314
        %v703 = vunpack.c.h.b16 %v314
        %v704 = vunpack.c.l.b16 %v315
        %v705 = vunpack.c.h.b16 %v315
        %v706 = vunpack.c.l.b16 %v316
        %v707 = vunpack.c.h.b16 %v316
        %v708 = vunpack.c.l.b16 %v317
        %v709 = vunpack.c.h.b16 %v317
        %v710 = vunpack.c.l.b16 %v318
        %v711 = vunpack.c.h.b16 %v318
        %v712 = vunpack.c.l.b16 %v319
        %v713 = vunpack.c.h.b16 %v319
        %v714 = vunpack.c.l.b16 %v320
        %v715 = vunpack.c.h.b16 %v320
        %v716 = vunpack.c.l.b16 %v321
        %v717 = vunpack.c.h.b16 %v321
        %v718 = vunpack.c.l.b16 %v322
        %v719 = vunpack.c.h.b16 %v322
        %v720 = vunpack.c.l.b16 %v323
        %v721 = vunpack.c.h.b16 %v323
        %v722 = vunpack.c.l.b16 %v324
        %v723 = vunpack.c.h.b16 %v324
        %v724 = vunpack.c.l.b16 %v325
        %v725 = vunpack.c.h.b16 %v325
        %v726 = vunpack.c.l.b16 %v326
        %v727 = vunpack.c.h.b16 %v326
        %v728 = vunpack.c.l.b16 %v327
        %v729 = vunpack.c.h.b16 %v327
        %v730 = vunpack.c.l.b16 %v328
        %v731 = vunpack.c.h.b16 %v328
        %v732 = vunpack.c.l.b16 %v329
        %v733 = vunpack.c.h.b16 %v329
        %v734 = vunpack.c.l.b16 %v330
        %v735 = vunpack.c.h.b16 %v330
        %v736 = vunpack.c.l.b16 %v331
        %v737 = vunpack.c.h.b16 %v331
        %v738 = vunpack.c.l.b16 %v332
        %v739 = vunpack.c.h.b16 %v332
        %v740 = vunpack.c.l.b16 %v333
        %v741 = vunpack.c.h.b16 %v333
        %v742 = vunpack.c.l.b16 %v334
        %v743 = vunpack.c.h.b16 %v334
        %v744 = vunpack.c.l.b16 %v335
        %v745 = vunpack.c.h.b16 %v335
        %v746 = vunpack.c.l.b16 %v336
        %v747 = vunpack.c.h.b16 %v336
        %v748 = vunpack.c.l.b16 %v337
        %v749 = vunpack.c.h.b16 %v337
        %v750 = vunpack.c.l.b16 %v338
        %v751 = vunpack.c.h.b16 %v338
        %v752 = vunpack.c.l.b16 %v339
        %v753 = vunpack.c.h.b16 %v339
        %v754 = vunpack.c.l.b16 %v340
        %v755 = vunpack.c.h.b16 %v340
        %v756 = vunpack.c.l.b16 %v341
        %v757 = vunpack.c.h.b16 %v341
        %v758 = vunpack.c.l.b16 %v342
        %v759 = vunpack.c.h.b16 %v342
        %v760 = vunpack.c.l.b16 %v343
        %v761 = vunpack.c.h.b16 %v343
        %v762 = vunpack.c.l.b16 %v344
        %v763 = vunpack.c.h.b16 %v344
        %v764 = vunpack.c.l.b16 %v345
        %v765 = vunpack.c.h.b16 %v345
        %v766 = vunpack.c.l.b16 %v346
        %v767 = vunpack.c.h.b16 %v346
        %v768 = vunpack.c.l.b16 %v347
        %v769 = vunpack.c.h.b16 %v347
        %v770 = vunpack.c.l.b16 %v348
        %v771 = vunpack.c.h.b16 %v348
        %v772 = vunpack.c.l.b16 %v349
        %v773 = vunpack.c.h.b16 %v349
        %v774 = vunpack.c.l.b16 %v350
        %v775 = vunpack.c.h.b16 %v350
        %v776 = vunpack.c.l.b16 %v351
        %v777 = vunpack.c.h.b16 %v351
        %v778 = vunpack.c.l.b16 %v352
        %v779 = vunpack.c.h.b16 %v352
        %v780 = vunpack.c.l.b16 %v353
        %v781 = vunpack.c.h.b16 %v353
        %v782 = vunpack.c.l.b16 %v354
        %v783 = vunpack.c.h.b16 %v354
        %v784 = vunpack.c.l.b16 %v355
        %v785 = vunpack.c.h.b16 %v355
        %v786 = vunpack.c.l.b16 %v356
        %v787 = vunpack.c.h.b16 %v356
        %v788 = vunpack.c.l.b16 %v357
        %v789 = vunpack.c.h.b16 %v357
        %v790 = vunpack.c.l.b16 %v358
        %v791 = vunpack.c.h.b16 %v358
        %v792 = vunpack.c.l.b16 %v359
        %v793 = vunpack.c.h.b16 %v359
        %v794 = vunpack.c.l.b16 %v360
        %v795 = vunpack.c.h.b16 %v360
        %v796 = vunpack.c.l.b16 %v361
        %v797 = vunpack.c.h.b16 %v361
        %v798 = vunpack.c.l.b16 %v362
        %v799 = vunpack.c.h.b16 %v362
        %v800 = vunpack.c.l.b16 %v363
        %v801 = vunpack.c.h.b16 %v363
        %v802 = vunpack.c.l.b16 %v364
        %v803 = vunpack.c.h.b16 %v364
        %v804 = vunpack.c.l.b16 %v365
        %v805 = vunpack.c.h.b16 %v365
        %v806 = vunpack.c.l.b16 %v366
        %v807 = vunpack.c.h.b16 %v366
        %v808 = vunpack.c.l.b16 %v367
        %v809 = vunpack.c.h.b16 %v367
        %v810 = vunpack.c.l.b16 %v368
        %v811 = vunpack.c.h.b16 %v368
        %v812 = vunpack.c.l.b16 %v369
        %v813 = vunpack.c.h.b16 %v369
        %v814 = vunpack.c.l.b16 %v370
        %v815 = vunpack.c.h.b16 %v370
        %v816 = vunpack.c.l.b16 %v371
        %v817 = vunpack.c.h.b16 %v371
        %v818 = vunpack.c.l.b16 %v372
        %v819 = vunpack.c.h.b16 %v372
        %v820 = vunpack.c.l.b16 %v373
        %v821 = vunpack.c.h.b16 %v373
        %v822 = vunpack.c.l.b16 %v374
        %v823 = vunpack.c.h.b16 %v374
        %v824 = vunpack.c.l.b16 %v375
        %v825 = vunpack.c.h.b16 %v375
        %v826 = vunpack.c.l.b16 %v376
        %v827 = vunpack.c.h.b16 %v376
        %v828 = vunpack.c.l.b16 %v377
        %v829 = vunpack.c.h.b16 %v377
        %v830 = vunpack.c.l.b16 %v378
        %v831 = vunpack.c.h.b16 %v378
        %v832 = vunpack.c.l.b16 %v379
        %v833 = vunpack.c.h.b16 %v379
        %v834 = vunpack.c.l.b16 %v380
        %v835 = vunpack.c.h.b16 %v380
        %v836 = vunpack.c.l.b16 %v381
        %v837 = vunpack.c.h.b16 %v381
        %v838 = vunpack.c.l.b16 %v382
        %v839 = vunpack.c.h.b16 %v382
        %v840 = vunpack.c.l.b16 %v383
        %v841 = vunpack.c.h.b16 %v383
        %v842 = vunpack.c.l.b16 %v384
        %v843 = vunpack.c.h.b16 %v384
        %v844 = vunpack.c.l.b16 %v385
        %v845 = vunpack.c.h.b16 %v385
        %v846 = vunpack.c.l.b16 %v386
        %v847 = vunpack.c.h.b16 %v386
        %v848 = vunpack.c.l.b16 %v387
        %v849 = vunpack.c.h.b16 %v387
        %v850 = vunpack.c.l.b16 %v388
        %v851 = vunpack.c.h.b16 %v388
        %v852 = vunpack.c.l.b16 %v389
        %v853 = vunpack.c.h.b16 %v389
        %v854 = vunpack.c.l.b16 %v390
        %v855 = vunpack.c.h.b16 %v390
        %v856 = vunpack.c.l.b16 %v391
        %v857 = vunpack.c.h.b16 %v391
        %v858 = vunpack.c.l.b16 %v392
        %v859 = vunpack.c.h.b16 %v392
        %v860 = vunpack.c.l.b16 %v393
        %v861 = vunpack.c.h.b16 %v393
        %v862 = vunpack.c.l.b16 %v394
        %v863 = vunpack.c.h.b16 %v394
        %v864 = vunpack.c.l.b16 %v395
        %v865 = vunpack.c.h.b16 %v395
        %v866 = vunpack.c.l.b16 %v396
        %v867 = vunpack.c.h.b16 %v396
        %v868 = vunpack.c.l.b16 %v397
        %v869 = vunpack.c.h.b16 %v397
        %v870 = vunpack.c.l.b16 %v398
        %v871 = vunpack.c.h.b16 %v398
        %v872 = vunpack.c.l.b16 %v399
        %v873 = vunpack.c.h.b16 %v399
        %v874 = vunpack.c.l.b16 %v400
        %v875 = vunpack.c.h.b16 %v400
        %v876 = vunpack.c.l.b16 %v401
        %v877 = vunpack.c.h.b16 %v401
        %v878 = vunpack.c.l.b16 %v402
        %v879 = vunpack.c.h.b16 %v402
        %v880 = vunpack.c.l.b16 %v403
        %v881 = vunpack.c.h.b16 %v403
        %v882 = vunpack.c.l.b16 %v404
        %v883 = vunpack.c.h.b16 %v404
        %v884 = vunpack.c.l.b16 %v405
        %v885 = vunpack.c.h.b16 %v405
        %v886 = vunpack.c.l.b16 %v406
        %v887 = vunpack.c.h.b16 %v406
        %v888 = vunpack.c.l.b16 %v407
        %v889 = vunpack.c.h.b16 %v407
        %v890 = vunpack.c.l.b16 %v408
        %v891 = vunpack.c.h.b16 %v408
        %v892 = vunpack.c.l.b16 %v409
        %v893 = vunpack.c.h.b16 %v409
        %v894 = vunpack.c.l.b16 %v410
        %v895 = vunpack.c.h.b16 %v410
        %v896 = vunpack.c.l.b16 %v411
        %v897 = vunpack.c.h.b16 %v411
        %v898 = vunpack.c.l.b16 %v412
        %v899 = vunpack.c.h.b16 %v412
        %v900 = vunpack.c.l.b16 %v413
        %v901 = vunpack.c.h.b16 %v413
        %v902 = vunpack.c.l.b16 %v414
        %v903 = vunpack.c.h.b16 %v414
        %v904 = vunpack.c.l.b16 %v415
        %v905 = vunpack.c.h.b16 %v415
        %v906 = vunpack.c.l.b16 %v416
        %v907 = vunpack.c.h.b16 %v416
        %v908 = vunpack.c.l.b16 %v417
        %v909 = vunpack.c.h.b16 %v417
        %v910 = vunpack.c.l.b16 %v418
        %v911 = vunpack.c.h.b16 %v418
        %v912 = vunpack.c.l.b16 %v419
        %v913 = vunpack.c.h.b16 %v419
        %v914 = vunpack.c.l.b16 %v420
        %v915 = vunpack.c.h.b16 %v420
        %v916 = vunpack.c.l.b16 %v421
        %v917 = vunpack.c.h.b16 %v421
        %v918 = vunpack.c.l.b16 %v422
        %v919 = vunpack.c.h.b16 %v422
        %v920 = vunpack.c.l.b16 %v423
        %v921 = vunpack.c.h.b16 %v423
        %v922 = vunpack.c.l.b16 %v424
        %v923 = vunpack.c.h.b16 %v424
        %v924 = vunpack.c.l.b16 %v425
        %v925 = vunpack.c.h.b16 %v425
        %v926 = vunpack.c.l.b16 %v426
        %v927 = vunpack.c.h.b16 %v426
        %v928 = vunpack.c.l.b16 %v427
        %v929 = vunpack.c.h.b16 %v427
        %v930 = vunpack.c.l.b16 %v428
        %v931 = vunpack.c.h.b16 %v428
        %v932 = vunpack.c.l.b16 %v429
        %v933 = vunpack.c.h.b16 %v429
        %v934 = vunpack.c.l.b16 %v430
        %v935 = vunpack.c.h.b16 %v430
        %v936 = vunpack.c.l.b16 %v431
        %v937 = vunpack.c.h.b16 %v431
        %v938 = vpack.c.b16 %v690, %v682
        %v939 = vpack.c.b16 %v691, %v683
        %v940 = vpack.c.b16 %v692, %v684
        %v941 = vpack.c.b16 %v693, %v685
        %v942 = vpack.c.b16 %v694, %v686
        %v943 = vpack.c.b16 %v695, %v687
        %v944 = vpack.c.b16 %v696, %v688
        %v945 = vpack.c.b16 %v697, %v689
        %v946 = vpack.c.b16 %v706, %v698
        %v947 = vpack.c.b16 %v707, %v699
        %v948 = vpack.c.b16 %v708, %v700
        %v949 = vpack.c.b16 %v709, %v701
        %v950 = vpack.c.b16 %v710, %v702
        %v951 = vpack.c.b16 %v711, %v703
        %v952 = vpack.c.b16 %v712, %v704
        %v953 = vpack.c.b16 %v713, %v705
        %v954 = vpack.c.b16 %v722, %v714
        %v955 = vpack.c.b16 %v723, %v715
        %v956 = vpack.c.b16 %v724, %v716
        %v957 = vpack.c.b16 %v725, %v717
        %v958 = vpack.c.b16 %v726, %v718
        %v959 = vpack.c.b16 %v727, %v719
        %v960 = vpack.c.b16 %v728, %v720
        %v961 = vpack.c.b16 %v729, %v721
        %v962 = vpack.c.b16 %v738, %v730
        %v963 = vpack.c.b16 %v739, %v731
        %v964 = vpack.c.b16 %v740, %v732
        %v965 = vpack.c.b16 %v741, %v733
        %v966 = vpack.c.b16 %v742, %v734
        %v967 = vpack.c.b16 %v743, %v735
        %v968 = vpack.c.b16 %v744, %v736
        %v969 = vpack.c.b16 %v745, %v737
        %v970 = vpack.c.b16 %v754, %v746
        %v971 = vpack.c.b16 %v755, %v747
        %v972 = vpack.c.b16 %v756, %v748
        %v973 = vpack.c.b16 %v757, %v749
        %v974 = vpack.c.b16 %v758, %v750
        %v975 = vpack.c.b16 %v759, %v751
        %v976 = vpack.c.b16 %v760, %v752
        %v977 = vpack.c.b16 %v761, %v753
        %v978 = vpack.c.b16 %v770, %v762
        %v979 = vpack.c.b16 %v771, %v763
        %v980 = vpack.c.b16 %v772, %v764
        %v981 = vpack.c.b16 %v773, %v765
        %v982 = vpack.c.b16 %v774, %v766
        %v983 = vpack.c.b16 %v775, %v767
        %v984 = vpack.c.b16 %v776, %v768
        %v985 = vpack.c.b16 %v777, %v769
        %v986 = vpack.c.b16 %v786, %v778
        %v987 = vpack.c.b16 %v787, %v779
        %v988 = vpack.c.b16 %v788, %v780
        %v989 = vpack.c.b16 %v789, %v781
        %v990 = vpack.c.b16 %v790, %v782
        %v991 = vpack.c.b16 %v791, %v783
        %v992 = vpack.c.b16 %v792, %v784
        %v993 = vpack.c.b16 %v793, %v785
        %v994 = vpack.c.b16 %v802, %v794
        %v995 = vpack.c.b16 %v803, %v795
        %v996 = vpack.c.b16 %v804, %v796
        %v997 = vpack.c.b16 %v805, %v797
        %v998 = vpack.c.b16 %v806, %v798
        %v999 = vpack.c.b16 %v807, %v799
        %v1000 = vpack.c.b16 %v808, %v800
        %v1001 = vpack.c.b16 %v809, %v801
        %v1002 = vpack.c.b16 %v818, %v810
        %v1003 = vpack.c.b16 %v819, %v811
        %v1004 = vpack.c.b16 %v820, %v812
        %v1005 = vpack.c.b16 %v821, %v813
        %v1006 = vpack.c.b16 %v822, %v814
        %v1007 = vpack.c.b16 %v823, %v815
        %v1008 = vpack.c.b16 %v824, %v816
        %v1009 = vpack.c.b16 %v825, %v817
        %v1010 = vpack.c.b16 %v834, %v826
        %v1011 = vpack.c.b16 %v835, %v827
        %v1012 = vpack.c.b16 %v836, %v828
        %v1013 = vpack.c.b16 %v837, %v829
        %v1014 = vpack.c.b16 %v838, %v830
        %v1015 = vpack.c.b16 %v839, %v831
        %v1016 = vpack.c.b16 %v840, %v832
        %v1017 = vpack.c.b16 %v841, %v833
        %v1018 = vpack.c.b16 %v850, %v842
        %v1019 = vpack.c.b16 %v851, %v843
        %v1020 = vpack.c.b16 %v852, %v844
        %v1021 = vpack.c.b16 %v853, %v845
        %v1022 = vpack.c.b16 %v854, %v846
        %v1023 = vpack.c.b16 %v855, %v847
        %v1024 = vpack.c.b16 %v856, %v848
        %v1025 = vpack.c.b16 %v857, %v849
        %v1026 = vpack.c.b16 %v866, %v858
        %v1027 = vpack.c.b16 %v867, %v859
        %v1028 = vpack.c.b16 %v868, %v860
        %v1029 = vpack.c.b16 %v869, %v861
        %v1030 = vpack.c.b16 %v870, %v862
        %v1031 = vpack.c.b16 %v871, %v863
        %v1032 = vpack.c.b16 %v872, %v864
        %v1033 = vpack.c.b16 %v873, %v865
        %v1034 = vpack.c.b16 %v882, %v874
        %v1035 = vpack.c.b16 %v883, %v875
        %v1036 = vpack.c.b16 %v884, %v876
        %v1037 = vpack.c.b16 %v885, %v877
        %v1038 = vpack.c.b16 %v886, %v878
        %v1039 = vpack.c.b16 %v887, %v879
        %v1040 = vpack.c.b16 %v888, %v880
        %v1041 = vpack.c.b16 %v889, %v881
        %v1042 = vpack.c.b16 %v898, %v890
        %v1043 = vpack.c.b16 %v899, %v891
        %v1044 = vpack.c.b16 %v900, %v892
        %v1045 = vpack.c.b16 %v901, %v893
        %v1046 = vpack.c.b16 %v902, %v894
        %v1047 = vpack.c.b16 %v903, %v895
        %v1048 = vpack.c.b16 %v904, %v896
        %v1049 = vpack.c.b16 %v905, %v897
        %v1050 = vpack.c.b16 %v914, %v906
        %v1051 = vpack.c.b16 %v915, %v907
        %v1052 = vpack.c.b16 %v916, %v908
        %v1053 = vpack.c.b16 %v917, %v909
        %v1054 = vpack.c.b16 %v918, %v910
        %v1055 = vpack.c.b16 %v919, %v911
        %v1056 = vpack.c.b16 %v920, %v912
        %v1057 = vpack.c.b16 %v921, %v913
        %v1058 = vpack.c.b16 %v930, %v922
        %v1059 = vpack.c.b16 %v931, %v923
        %v1060 = vpack.c.b16 %v932, %v924
        %v1061 = vpack.c.b16 %v933, %v925
        %v1062 = vpack.c.b16 %v934, %v926
        %v1063 = vpack.c.b16 %v935, %v927
        %v1064 = vpack.c.b16 %v936, %v928
        %v1065 = vpack.c.b16 %v937, %v929
        %1194 = vmatprep.subr.bf16.mxu0 %v939
        %1195 = vmatpush1.bf16.msra.mxu0 %v938
        %1196 = vmatprep.subr.bf16.mxu0 %v947
        %1197 = vmatpush1.bf16.msra.mxu0 %v946
        %1198 = vmatprep.subr.bf16.mxu0 %v955
        %1199 = vmatpush1.bf16.msra.mxu0 %v954
        %1200 = vmatprep.subr.bf16.mxu0 %v963
        %1201 = vmatpush1.bf16.msra.mxu0 %v962
        %1202 = vmatprep.subr.bf16.mxu0 %v971
        %1203 = vmatpush1.bf16.msra.mxu0 %v970
        %1204 = vmatprep.subr.bf16.mxu0 %v979
        %1205 = vmatpush1.bf16.msra.mxu0 %v978
        %1206 = vmatprep.subr.bf16.mxu0 %v987
        %1207 = vmatpush1.bf16.msra.mxu0 %v986
        %1208 = vmatprep.subr.bf16.mxu0 %v995
        %1209 = vmatpush1.bf16.msra.mxu0 %v994
        %1210 = vmatprep.subr.bf16.mxu0 %v1003
        %1211 = vmatpush1.bf16.msra.mxu0 %v1002
        %1212 = vmatprep.subr.bf16.mxu0 %v1011
        %1213 = vmatpush1.bf16.msra.mxu0 %v1010
        %1214 = vmatprep.subr.bf16.mxu0 %v1019
        %1215 = vmatpush1.bf16.msra.mxu0 %v1018
        %1216 = vmatprep.subr.bf16.mxu0 %v1027
        %1217 = vmatpush1.bf16.msra.mxu0 %v1026
        %1218 = vmatprep.subr.bf16.mxu0 %v1035
        %1219 = vmatpush1.bf16.msra.mxu0 %v1034
        %1220 = vmatprep.subr.bf16.mxu0 %v1043
        %1221 = vmatpush1.bf16.msra.mxu0 %v1042
        %1222 = vmatprep.subr.bf16.mxu0 %v1051
        %1223 = vmatpush1.bf16.msra.mxu0 %v1050
        %1224 = vmatprep.subr.bf16.mxu0 %v1059
        %1225 = vmatpush1.bf16.msra.mxu0 %v1058
        %1226 = vmatprep.mubr.bf16.mxu0 %v523
        %1227 = vmatmul.mubr.bf16.gmra.mrb[0].mxu0 %v522
        %v1228 = vpop.f32.mrb[0].mxu0
        %v1229 = vadd.f32 %v437, %v1228
        %v1230 = vpop.f32.mrb[0].mxu0
        %v1231 = vadd.f32 %v441, %v1230
        %v1232 = vpop.f32.mrb[0].mxu0
        %v1233 = vadd.f32 %v437, %v1232
        %v1234 = vpop.f32.mrb[0].mxu0
        %v1235 = vadd.f32 %v441, %v1234
        %1236 = vmatprep.mubr.bf16.mxu0 %v525
        %1237 = vmatmul.mubr.bf16.gmra.mrb[0].mxu0 %v524
        %v1238 = vpop.f32.mrb[0].mxu0
        %v1239 = vadd.f32 %v437, %v1238
        %v1240 = vpop.f32.mrb[0].mxu0
        %v1241 = vadd.f32 %v441, %v1240
        %v1242 = vpop.f32.mrb[0].mxu0
        %v1243 = vadd.f32 %v437, %v1242
        %v1244 = vpop.f32.mrb[0].mxu0
        %v1245 = vadd.f32 %v441, %v1244
        %1246 = vmatprep.mubr.bf16.mxu0 %v527
        %1247 = vmatmul.mubr.bf16.gmra.mrb[0].mxu0 %v526
        %v1248 = vpop.f32.mrb[0].mxu0
        %v1249 = vadd.f32 %v437, %v1248
        %v1250 = vpop.f32.mrb[0].mxu0
        %v1251 = vadd.f32 %v441, %v1250
        %v1252 = vpop.f32.mrb[0].mxu0
        %v1253 = vadd.f32 %v437, %v1252
        %v1254 = vpop.f32.mrb[0].mxu0
        %v1255 = vadd.f32 %v441, %v1254
        %1256 = vmatprep.mubr.bf16.mxu0 %v529
        %1257 = vmatmul.mubr.bf16.gmra.mrb[0].mxu0 %v528
        %v1258 = vpop.f32.mrb[0].mxu0
        %v1259 = vadd.f32 %v437, %v1258
        %v1260 = vpop.f32.mrb[0].mxu0
        %v1261 = vadd.f32 %v441, %v1260
        %v1262 = vpop.f32.mrb[0].mxu0
        %v1263 = vadd.f32 %v437, %v1262
        %v1264 = vpop.f32.mrb[0].mxu0
        %v1265 = vadd.f32 %v441, %v1264
        %1266 = vmatprep.mubr.bf16.mxu0 %v531
        %1267 = vmatmul.mubr.bf16.gmra.mrb[0].mxu0 %v530
        %v1268 = vpop.f32.mrb[0].mxu0
        %v1269 = vadd.f32 %v437, %v1268
        %v1270 = vpop.f32.mrb[0].mxu0
        %v1271 = vadd.f32 %v441, %v1270
        %v1272 = vpop.f32.mrb[0].mxu0
        %v1273 = vadd.f32 %v437, %v1272
        %v1274 = vpop.f32.mrb[0].mxu0
        %v1275 = vadd.f32 %v441, %v1274
        %1276 = vmatprep.mubr.bf16.mxu0 %v533
        %1277 = vmatmul.mubr.bf16.gmra.mrb[0].mxu0 %v532
        %v1278 = vpop.f32.mrb[0].mxu0
        %v1279 = vadd.f32 %v437, %v1278
        %v1280 = vpop.f32.mrb[0].mxu0
        %v1281 = vadd.f32 %v441, %v1280
        %v1282 = vpop.f32.mrb[0].mxu0
        %v1283 = vadd.f32 %v437, %v1282
        %v1284 = vpop.f32.mrb[0].mxu0
        %v1285 = vadd.f32 %v441, %v1284
        %1286 = vmatprep.mubr.bf16.mxu0 %v535
        %1287 = vmatmul.mubr.bf16.gmra.mrb[0].mxu0 %v534
        %v1288 = vpop.f32.mrb[0].mxu0
        %v1289 = vadd.f32 %v437, %v1288
        %v1290 = vpop.f32.mrb[0].mxu0
        %v1291 = vadd.f32 %v441, %v1290
        %v1292 = vpop.f32.mrb[0].mxu0
        %v1293 = vadd.f32 %v437, %v1292
        %v1294 = vpop.f32.mrb[0].mxu0
        %v1295 = vadd.f32 %v441, %v1294
        %1296 = vmatprep.mubr.bf16.mxu0 %v537
        %1297 = vmatmul.mubr.bf16.gmra.mrb[0].mxu0 %v536
        %v1298 = vpop.f32.mrb[0].mxu0
        %v1299 = vadd.f32 %v437, %v1298
        %v1300 = vpop.f32.mrb[0].mxu0
        %v1301 = vadd.f32 %v441, %v1300
        %v1302 = vpop.f32.mrb[0].mxu0
        %v1303 = vadd.f32 %v437, %v1302
        %v1304 = vpop.f32.mrb[0].mxu0
        %v1305 = vadd.f32 %v441, %v1304
        %1306 = vdwg.mxu0
        %1307 = vmatprep.subr.bf16.mxu0 %v941
        %1308 = vmatpush1.bf16.msra.mxu0 %v940
        %1309 = vmatprep.subr.bf16.mxu0 %v949
        %1310 = vmatpush1.bf16.msra.mxu0 %v948
        %1311 = vmatprep.subr.bf16.mxu0 %v957
        %1312 = vmatpush1.bf16.msra.mxu0 %v956
        %1313 = vmatprep.subr.bf16.mxu0 %v965
        %1314 = vmatpush1.bf16.msra.mxu0 %v964
        %1315 = vmatprep.subr.bf16.mxu0 %v973
        %1316 = vmatpush1.bf16.msra.mxu0 %v972
        %1317 = vmatprep.subr.bf16.mxu0 %v981
        %1318 = vmatpush1.bf16.msra.mxu0 %v980
        %1319 = vmatprep.subr.bf16.mxu0 %v989
        %1320 = vmatpush1.bf16.msra.mxu0 %v988
        %1321 = vmatprep.subr.bf16.mxu0 %v997
        %1322 = vmatpush1.bf16.msra.mxu0 %v996
        %1323 = vmatprep.subr.bf16.mxu0 %v1005
        %1324 = vmatpush1.bf16.msra.mxu0 %v1004
        %1325 = vmatprep.subr.bf16.mxu0 %v1013
        %1326 = vmatpush1.bf16.msra.mxu0 %v1012
        %1327 = vmatprep.subr.bf16.mxu0 %v1021
        %1328 = vmatpush1.bf16.msra.mxu0 %v1020
        %1329 = vmatprep.subr.bf16.mxu0 %v1029
        %1330 = vmatpush1.bf16.msra.mxu0 %v1028
        %1331 = vmatprep.subr.bf16.mxu0 %v1037
        %1332 = vmatpush1.bf16.msra.mxu0 %v1036
        %1333 = vmatprep.subr.bf16.mxu0 %v1045
        %1334 = vmatpush1.bf16.msra.mxu0 %v1044
        %1335 = vmatprep.subr.bf16.mxu0 %v1053
        %1336 = vmatpush1.bf16.msra.mxu0 %v1052
        %1337 = vmatprep.subr.bf16.mxu0 %v1061
        %1338 = vmatpush1.bf16.msra.mxu0 %v1060
        %1339 = vmatprep.mubr.bf16.mxu0 %v523
        %1340 = vmatmul.mubr.bf16.gmra.mrb[0].mxu0 %v522
        %v1341 = vpop.f32.mrb[0].mxu0
        %v1342 = vadd.f32 %v445, %v1341
        %v1343 = vpop.f32.mrb[0].mxu0
        %v1344 = vadd.f32 %v449, %v1343
        %v1345 = vpop.f32.mrb[0].mxu0
        %v1346 = vadd.f32 %v445, %v1345
        %v1347 = vpop.f32.mrb[0].mxu0
        %v1348 = vadd.f32 %v449, %v1347
        %1349 = vmatprep.mubr.bf16.mxu0 %v525
        %1350 = vmatmul.mubr.bf16.gmra.mrb[0].mxu0 %v524
        %v1351 = vpop.f32.mrb[0].mxu0
        %v1352 = vadd.f32 %v445, %v1351
        %v1353 = vpop.f32.mrb[0].mxu0
        %v1354 = vadd.f32 %v449, %v1353
        %v1355 = vpop.f32.mrb[0].mxu0
        %v1356 = vadd.f32 %v445, %v1355
        %v1357 = vpop.f32.mrb[0].mxu0
        %v1358 = vadd.f32 %v449, %v1357
        %1359 = vmatprep.mubr.bf16.mxu0 %v527
        %1360 = vmatmul.mubr.bf16.gmra.mrb[0].mxu0 %v526
        %v1361 = vpop.f32.mrb[0].mxu0
        %v1362 = vadd.f32 %v445, %v1361
        %v1363 = vpop.f32.mrb[0].mxu0
        %v1364 = vadd.f32 %v449, %v1363
        %v1365 = vpop.f32.mrb[0].mxu0
        %v1366 = vadd.f32 %v445, %v1365
        %v1367 = vpop.f32.mrb[0].mxu0
        %v1368 = vadd.f32 %v449, %v1367
        %1369 = vmatprep.mubr.bf16.mxu0 %v529
        %1370 = vmatmul.mubr.bf16.gmra.mrb[0].mxu0 %v528
        %v1371 = vpop.f32.mrb[0].mxu0
        %v1372 = vadd.f32 %v445, %v1371
        %v1373 = vpop.f32.mrb[0].mxu0
        %v1374 = vadd.f32 %v449, %v1373
        %v1375 = vpop.f32.mrb[0].mxu0
        %v1376 = vadd.f32 %v445, %v1375
        %v1377 = vpop.f32.mrb[0].mxu0
        %v1378 = vadd.f32 %v449, %v1377
        %1379 = vmatprep.mubr.bf16.mxu0 %v531
        %1380 = vmatmul.mubr.bf16.gmra.mrb[0].mxu0 %v530
        %v1381 = vpop.f32.mrb[0].mxu0
        %v1382 = vadd.f32 %v445, %v1381
        %v1383 = vpop.f32.mrb[0].mxu0
        %v1384 = vadd.f32 %v449, %v1383
        %v1385 = vpop.f32.mrb[0].mxu0
        %v1386 = vadd.f32 %v445, %v1385
        %v1387 = vpop.f32.mrb[0].mxu0
        %v1388 = vadd.f32 %v449, %v1387
        %1389 = vmatprep.mubr.bf16.mxu0 %v533
        %1390 = vmatmul.mubr.bf16.gmra.mrb[0].mxu0 %v532
        %v1391 = vpop.f32.mrb[0].mxu0
        %v1392 = vadd.f32 %v445, %v1391
        %v1393 = vpop.f32.mrb[0].mxu0
        %v1394 = vadd.f32 %v449, %v1393
        %v1395 = vpop.f32.mrb[0].mxu0
        %v1396 = vadd.f32 %v445, %v1395
        %v1397 = vpop.f32.mrb[0].mxu0
        %v1398 = vadd.f32 %v449, %v1397
        %1399 = vmatprep.mubr.bf16.mxu0 %v535
        %1400 = vmatmul.mubr.bf16.gmra.mrb[0].mxu0 %v534
        %v1401 = vpop.f32.mrb[0].mxu0
        %v1402 = vadd.f32 %v445, %v1401
        %v1403 = vpop.f32.mrb[0].mxu0
        %v1404 = vadd.f32 %v449, %v1403
        %v1405 = vpop.f32.mrb[0].mxu0
        %v1406 = vadd.f32 %v445, %v1405
        %v1407 = vpop.f32.mrb[0].mxu0
        %v1408 = vadd.f32 %v449, %v1407
        %1409 = vmatprep.mubr.bf16.mxu0 %v537
        %1410 = vmatmul.mubr.bf16.gmra.mrb[0].mxu0 %v536
        %v1411 = vpop.f32.mrb[0].mxu0
        %v1412 = vadd.f32 %v445, %v1411
        %v1413 = vpop.f32.mrb[0].mxu0
        %v1414 = vadd.f32 %v449, %v1413
        %v1415 = vpop.f32.mrb[0].mxu0
        %v1416 = vadd.f32 %v445, %v1415
        %v1417 = vpop.f32.mrb[0].mxu0
        %v1418 = vadd.f32 %v449, %v1417
        %1419 = vdwg.mxu0
        %1420 = vmatprep.subr.bf16.mxu0 %v943
        %1421 = vmatpush1.bf16.msra.mxu0 %v942
        %1422 = vmatprep.subr.bf16.mxu0 %v951
        %1423 = vmatpush1.bf16.msra.mxu0 %v950
        %1424 = vmatprep.subr.bf16.mxu0 %v959
        %1425 = vmatpush1.bf16.msra.mxu0 %v958
        %1426 = vmatprep.subr.bf16.mxu0 %v967
        %1427 = vmatpush1.bf16.msra.mxu0 %v966
        %1428 = vmatprep.subr.bf16.mxu0 %v975
        %1429 = vmatpush1.bf16.msra.mxu0 %v974
        %1430 = vmatprep.subr.bf16.mxu0 %v983
        %1431 = vmatpush1.bf16.msra.mxu0 %v982
        %1432 = vmatprep.subr.bf16.mxu0 %v991
        %1433 = vmatpush1.bf16.msra.mxu0 %v990
        %1434 = vmatprep.subr.bf16.mxu0 %v999
        %1435 = vmatpush1.bf16.msra.mxu0 %v998
        %1436 = vmatprep.subr.bf16.mxu0 %v1007
        %1437 = vmatpush1.bf16.msra.mxu0 %v1006
        %1438 = vmatprep.subr.bf16.mxu0 %v1015
        %1439 = vmatpush1.bf16.msra.mxu0 %v1014
        %1440 = vmatprep.subr.bf16.mxu0 %v1023
        %1441 = vmatpush1.bf16.msra.mxu0 %v1022
        %1442 = vmatprep.subr.bf16.mxu0 %v1031
        %1443 = vmatpush1.bf16.msra.mxu0 %v1030
        %1444 = vmatprep.subr.bf16.mxu0 %v1039
        %1445 = vmatpush1.bf16.msra.mxu0 %v1038
        %1446 = vmatprep.subr.bf16.mxu0 %v1047
        %1447 = vmatpush1.bf16.msra.mxu0 %v1046
        %1448 = vmatprep.subr.bf16.mxu0 %v1055
        %1449 = vmatpush1.bf16.msra.mxu0 %v1054
        %1450 = vmatprep.subr.bf16.mxu0 %v1063
        %1451 = vmatpush1.bf16.msra.mxu0 %v1062
        %1452 = vmatprep.mubr.bf16.mxu0 %v523
        %1453 = vmatmul.mubr.bf16.gmra.mrb[0].mxu0 %v522
        %v1454 = vpop.f32.mrb[0].mxu0
        %v1455 = vadd.f32 %v453, %v1454
        %v1456 = vpop.f32.mrb[0].mxu0
        %v1457 = vadd.f32 %v457, %v1456
        %v1458 = vpop.f32.mrb[0].mxu0
        %v1459 = vadd.f32 %v453, %v1458
        %v1460 = vpop.f32.mrb[0].mxu0
        %v1461 = vadd.f32 %v457, %v1460
        %1462 = vmatprep.mubr.bf16.mxu0 %v525
        %1463 = vmatmul.mubr.bf16.gmra.mrb[0].mxu0 %v524
        %v1464 = vpop.f32.mrb[0].mxu0
        %v1465 = vadd.f32 %v453, %v1464
        %v1466 = vpop.f32.mrb[0].mxu0
        %v1467 = vadd.f32 %v457, %v1466
        %v1468 = vpop.f32.mrb[0].mxu0
        %v1469 = vadd.f32 %v453, %v1468
        %v1470 = vpop.f32.mrb[0].mxu0
        %v1471 = vadd.f32 %v457, %v1470
        %1472 = vmatprep.mubr.bf16.mxu0 %v527
        %1473 = vmatmul.mubr.bf16.gmra.mrb[0].mxu0 %v526
        %v1474 = vpop.f32.mrb[0].mxu0
        %v1475 = vadd.f32 %v453, %v1474
        %v1476 = vpop.f32.mrb[0].mxu0
        %v1477 = vadd.f32 %v457, %v1476
        %v1478 = vpop.f32.mrb[0].mxu0
        %v1479 = vadd.f32 %v453, %v1478
        %v1480 = vpop.f32.mrb[0].mxu0
        %v1481 = vadd.f32 %v457, %v1480
        %1482 = vmatprep.mubr.bf16.mxu0 %v529
        %1483 = vmatmul.mubr.bf16.gmra.mrb[0].mxu0 %v528
        %v1484 = vpop.f32.mrb[0].mxu0
        %v1485 = vadd.f32 %v453, %v1484
        %v1486 = vpop.f32.mrb[0].mxu0
        %v1487 = vadd.f32 %v457, %v1486
        %v1488 = vpop.f32.mrb[0].mxu0
        %v1489 = vadd.f32 %v453, %v1488
        %v1490 = vpop.f32.mrb[0].mxu0
        %v1491 = vadd.f32 %v457, %v1490
        %1492 = vmatprep.mubr.bf16.mxu0 %v531
        %1493 = vmatmul.mubr.bf16.gmra.mrb[0].mxu0 %v530
        %v1494 = vpop.f32.mrb[0].mxu0
        %v1495 = vadd.f32 %v453, %v1494
        %v1496 = vpop.f32.mrb[0].mxu0
        %v1497 = vadd.f32 %v457, %v1496
        %v1498 = vpop.f32.mrb[0].mxu0
        %v1499 = vadd.f32 %v453, %v1498
        %v1500 = vpop.f32.mrb[0].mxu0
        %v1501 = vadd.f32 %v457, %v1500
        %1502 = vmatprep.mubr.bf16.mxu0 %v533
        %1503 = vmatmul.mubr.bf16.gmra.mrb[0].mxu0 %v532
        %v1504 = vpop.f32.mrb[0].mxu0
        %v1505 = vadd.f32 %v453, %v1504
        %v1506 = vpop.f32.mrb[0].mxu0
        %v1507 = vadd.f32 %v457, %v1506
        %v1508 = vpop.f32.mrb[0].mxu0
        %v1509 = vadd.f32 %v453, %v1508
        %v1510 = vpop.f32.mrb[0].mxu0
        %v1511 = vadd.f32 %v457, %v1510
        %1512 = vmatprep.mubr.bf16.mxu0 %v535
        %1513 = vmatmul.mubr.bf16.gmra.mrb[0].mxu0 %v534
        %v1514 = vpop.f32.mrb[0].mxu0
        %v1515 = vadd.f32 %v453, %v1514
        %v1516 = vpop.f32.mrb[0].mxu0
        %v1517 = vadd.f32 %v457, %v1516
        %v1518 = vpop.f32.mrb[0].mxu0
        %v1519 = vadd.f32 %v453, %v1518
        %v1520 = vpop.f32.mrb[0].mxu0
        %v1521 = vadd.f32 %v457, %v1520
        %1522 = vmatprep.mubr.bf16.mxu0 %v537
        %1523 = vmatmul.mubr.bf16.gmra.mrb[0].mxu0 %v536
        %v1524 = vpop.f32.mrb[0].mxu0
        %v1525 = vadd.f32 %v453, %v1524
        %v1526 = vpop.f32.mrb[0].mxu0
        %v1527 = vadd.f32 %v457, %v1526
        %v1528 = vpop.f32.mrb[0].mxu0
        %v1529 = vadd.f32 %v453, %v1528
        %v1530 = vpop.f32.mrb[0].mxu0
        %v1531 = vadd.f32 %v457, %v1530
        %1532 = vdwg.mxu0
        %1533 = vmatprep.subr.bf16.mxu0 %v945
        %1534 = vmatpush1.bf16.msra.mxu0 %v944
        %1535 = vmatprep.subr.bf16.mxu0 %v953
        %1536 = vmatpush1.bf16.msra.mxu0 %v952
        %1537 = vmatprep.subr.bf16.mxu0 %v961
        %1538 = vmatpush1.bf16.msra.mxu0 %v960
        %1539 = vmatprep.subr.bf16.mxu0 %v969
        %1540 = vmatpush1.bf16.msra.mxu0 %v968
        %1541 = vmatprep.subr.bf16.mxu0 %v977
        %1542 = vmatpush1.bf16.msra.mxu0 %v976
        %1543 = vmatprep.subr.bf16.mxu0 %v985
        %1544 = vmatpush1.bf16.msra.mxu0 %v984
        %1545 = vmatprep.subr.bf16.mxu0 %v993
        %1546 = vmatpush1.bf16.msra.mxu0 %v992
        %1547 = vmatprep.subr.bf16.mxu0 %v1001
        %1548 = vmatpush1.bf16.msra.mxu0 %v1000
        %1549 = vmatprep.subr.bf16.mxu0 %v1009
        %1550 = vmatpush1.bf16.msra.mxu0 %v1008
        %1551 = vmatprep.subr.bf16.mxu0 %v1017
        %1552 = vmatpush1.bf16.msra.mxu0 %v1016
        %1553 = vmatprep.subr.bf16.mxu0 %v1025
        %1554 = vmatpush1.bf16.msra.mxu0 %v1024
        %1555 = vmatprep.subr.bf16.mxu0 %v1033
        %1556 = vmatpush1.bf16.msra.mxu0 %v1032
        %1557 = vmatprep.subr.bf16.mxu0 %v1041
        %1558 = vmatpush1.bf16.msra.mxu0 %v1040
        %1559 = vmatprep.subr.bf16.mxu0 %v1049
        %1560 = vmatpush1.bf16.msra.mxu0 %v1048
        %1561 = vmatprep.subr.bf16.mxu0 %v1057
        %1562 = vmatpush1.bf16.msra.mxu0 %v1056
        %1563 = vmatprep.subr.bf16.mxu0 %v1065
        %1564 = vmatpush1.bf16.msra.mxu0 %v1064
        %1565 = vmatprep.mubr.bf16.mxu0 %v523
        %1566 = vmatmul.mubr.bf16.gmra.mrb[0].mxu0 %v522
        %v1567 = vpop.f32.mrb[0].mxu0
        %v1568 = vadd.f32 %v461, %v1567
        %v1569 = vpop.f32.mrb[0].mxu0
        %v1570 = vadd.f32 %v465, %v1569
        %v1571 = vpop.f32.mrb[0].mxu0
        %v1572 = vadd.f32 %v461, %v1571
        %v1573 = vpop.f32.mrb[0].mxu0
        %v1574 = vadd.f32 %v465, %v1573
        %1575 = vmatprep.mubr.bf16.mxu0 %v525
        %1576 = vmatmul.mubr.bf16.gmra.mrb[0].mxu0 %v524
        %v1577 = vpop.f32.mrb[0].mxu0
        %v1578 = vadd.f32 %v461, %v1577
        %v1579 = vpop.f32.mrb[0].mxu0
        %v1580 = vadd.f32 %v465, %v1579
        %v1581 = vpop.f32.mrb[0].mxu0
        %v1582 = vadd.f32 %v461, %v1581
        %v1583 = vpop.f32.mrb[0].mxu0
        %v1584 = vadd.f32 %v465, %v1583
        %1585 = vmatprep.mubr.bf16.mxu0 %v527
        %1586 = vmatmul.mubr.bf16.gmra.mrb[0].mxu0 %v526
        %v1587 = vpop.f32.mrb[0].mxu0
        %v1588 = vadd.f32 %v461, %v1587
        %v1589 = vpop.f32.mrb[0].mxu0
        %v1590 = vadd.f32 %v465, %v1589
        %v1591 = vpop.f32.mrb[0].mxu0
        %v1592 = vadd.f32 %v461, %v1591
        %v1593 = vpop.f32.mrb[0].mxu0
        %v1594 = vadd.f32 %v465, %v1593
        %1595 = vmatprep.mubr.bf16.mxu0 %v529
        %1596 = vmatmul.mubr.bf16.gmra.mrb[0].mxu0 %v528
        %v1597 = vpop.f32.mrb[0].mxu0
        %v1598 = vadd.f32 %v461, %v1597
        %v1599 = vpop.f32.mrb[0].mxu0
        %v1600 = vadd.f32 %v465, %v1599
        %v1601 = vpop.f32.mrb[0].mxu0
        %v1602 = vadd.f32 %v461, %v1601
        %v1603 = vpop.f32.mrb[0].mxu0
        %v1604 = vadd.f32 %v465, %v1603
        %1605 = vmatprep.mubr.bf16.mxu0 %v531
        %1606 = vmatmul.mubr.bf16.gmra.mrb[0].mxu0 %v530
        %v1607 = vpop.f32.mrb[0].mxu0
        %v1608 = vadd.f32 %v461, %v1607
        %v1609 = vpop.f32.mrb[0].mxu0
        %v1610 = vadd.f32 %v465, %v1609
        %v1611 = vpop.f32.mrb[0].mxu0
        %v1612 = vadd.f32 %v461, %v1611
        %v1613 = vpop.f32.mrb[0].mxu0
        %v1614 = vadd.f32 %v465, %v1613
        %1615 = vmatprep.mubr.bf16.mxu0 %v533
        %1616 = vmatmul.mubr.bf16.gmra.mrb[0].mxu0 %v532
        %v1617 = vpop.f32.mrb[0].mxu0
        %v1618 = vadd.f32 %v461, %v1617
        %v1619 = vpop.f32.mrb[0].mxu0
        %v1620 = vadd.f32 %v465, %v1619
        %v1621 = vpop.f32.mrb[0].mxu0
        %v1622 = vadd.f32 %v461, %v1621
        %v1623 = vpop.f32.mrb[0].mxu0
        %v1624 = vadd.f32 %v465, %v1623
        %1625 = vmatprep.mubr.bf16.mxu0 %v535
        %1626 = vmatmul.mubr.bf16.gmra.mrb[0].mxu0 %v534
        %v1627 = vpop.f32.mrb[0].mxu0
        %v1628 = vadd.f32 %v461, %v1627
        %v1629 = vpop.f32.mrb[0].mxu0
        %v1630 = vadd.f32 %v465, %v1629
        %v1631 = vpop.f32.mrb[0].mxu0
        %v1632 = vadd.f32 %v461, %v1631
        %v1633 = vpop.f32.mrb[0].mxu0
        %v1634 = vadd.f32 %v465, %v1633
        %1635 = vmatprep.mubr.bf16.mxu0 %v537
        %1636 = vmatmul.mubr.bf16.gmra.mrb[0].mxu0 %v536
        %v1637 = vpop.f32.mrb[0].mxu0
        %v1638 = vadd.f32 %v461, %v1637
        %v1639 = vpop.f32.mrb[0].mxu0
        %v1640 = vadd.f32 %v465, %v1639
        %v1641 = vpop.f32.mrb[0].mxu0
        %v1642 = vadd.f32 %v461, %v1641
        %v1643 = vpop.f32.mrb[0].mxu0
        %v1644 = vadd.f32 %v465, %v1643
        %1645 = vdwg.mxu0
        %v1646 = vmax.f32 %v1229, 0.0
        %v1647 = vmax.f32 %v1231, 0.0
        %v1648 = vmax.f32 %v1342, 0.0
        %v1649 = vmax.f32 %v1344, 0.0
        %v1650 = vmax.f32 %v1455, 0.0
        %v1651 = vmax.f32 %v1457, 0.0
        %v1652 = vmax.f32 %v1568, 0.0
        %v1653 = vmax.f32 %v1570, 0.0
        %v1654 = vmax.f32 %v1233, 0.0
        %v1655 = vmax.f32 %v1235, 0.0
        %v1656 = vmax.f32 %v1346, 0.0
        %v1657 = vmax.f32 %v1348, 0.0
        %v1658 = vmax.f32 %v1459, 0.0
        %v1659 = vmax.f32 %v1461, 0.0
        %v1660 = vmax.f32 %v1572, 0.0
        %v1661 = vmax.f32 %v1574, 0.0
        %v1662 = vmax.f32 %v1239, 0.0
        %v1663 = vmax.f32 %v1241, 0.0
        %v1664 = vmax.f32 %v1352, 0.0
        %v1665 = vmax.f32 %v1354, 0.0
        %v1666 = vmax.f32 %v1465, 0.0
        %v1667 = vmax.f32 %v1467, 0.0
        %v1668 = vmax.f32 %v1578, 0.0
        %v1669 = vmax.f32 %v1580, 0.0
        %v1670 = vmax.f32 %v1243, 0.0
        %v1671 = vmax.f32 %v1245, 0.0
        %v1672 = vmax.f32 %v1356, 0.0
        %v1673 = vmax.f32 %v1358, 0.0
        %v1674 = vmax.f32 %v1469, 0.0
        %v1675 = vmax.f32 %v1471, 0.0
        %v1676 = vmax.f32 %v1582, 0.0
        %v1677 = vmax.f32 %v1584, 0.0
        %v1678 = vmax.f32 %v1249, 0.0
        %v1679 = vmax.f32 %v1251, 0.0
        %v1680 = vmax.f32 %v1362, 0.0
        %v1681 = vmax.f32 %v1364, 0.0
        %v1682 = vmax.f32 %v1475, 0.0
        %v1683 = vmax.f32 %v1477, 0.0
        %v1684 = vmax.f32 %v1588, 0.0
        %v1685 = vmax.f32 %v1590, 0.0
        %v1686 = vmax.f32 %v1253, 0.0
        %v1687 = vmax.f32 %v1255, 0.0
        %v1688 = vmax.f32 %v1366, 0.0
        %v1689 = vmax.f32 %v1368, 0.0
        %v1690 = vmax.f32 %v1479, 0.0
        %v1691 = vmax.f32 %v1481, 0.0
        %v1692 = vmax.f32 %v1592, 0.0
        %v1693 = vmax.f32 %v1594, 0.0
        %v1694 = vmax.f32 %v1259, 0.0
        %v1695 = vmax.f32 %v1261, 0.0
        %v1696 = vmax.f32 %v1372, 0.0
        %v1697 = vmax.f32 %v1374, 0.0
        %v1698 = vmax.f32 %v1485, 0.0
        %v1699 = vmax.f32 %v1487, 0.0
        %v1700 = vmax.f32 %v1598, 0.0
        %v1701 = vmax.f32 %v1600, 0.0
        %v1702 = vmax.f32 %v1263, 0.0
        %v1703 = vmax.f32 %v1265, 0.0
        %v1704 = vmax.f32 %v1376, 0.0
        %v1705 = vmax.f32 %v1378, 0.0
        %v1706 = vmax.f32 %v1489, 0.0
        %v1707 = vmax.f32 %v1491, 0.0
        %v1708 = vmax.f32 %v1602, 0.0
        %v1709 = vmax.f32 %v1604, 0.0
        %v1710 = vmax.f32 %v1269, 0.0
        %v1711 = vmax.f32 %v1271, 0.0
        %v1712 = vmax.f32 %v1382, 0.0
        %v1713 = vmax.f32 %v1384, 0.0
        %v1714 = vmax.f32 %v1495, 0.0
        %v1715 = vmax.f32 %v1497, 0.0
        %v1716 = vmax.f32 %v1608, 0.0
        %v1717 = vmax.f32 %v1610, 0.0
        %v1718 = vmax.f32 %v1273, 0.0
        %v1719 = vmax.f32 %v1275, 0.0
        %v1720 = vmax.f32 %v1386, 0.0
        %v1721 = vmax.f32 %v1388, 0.0
        %v1722 = vmax.f32 %v1499, 0.0
        %v1723 = vmax.f32 %v1501, 0.0
        %v1724 = vmax.f32 %v1612, 0.0
        %v1725 = vmax.f32 %v1614, 0.0
        %v1726 = vmax.f32 %v1279, 0.0
        %v1727 = vmax.f32 %v1281, 0.0
        %v1728 = vmax.f32 %v1392, 0.0
        %v1729 = vmax.f32 %v1394, 0.0
        %v1730 = vmax.f32 %v1505, 0.0
        %v1731 = vmax.f32 %v1507, 0.0
        %v1732 = vmax.f32 %v1618, 0.0
        %v1733 = vmax.f32 %v1620, 0.0
        %v1734 = vmax.f32 %v1283, 0.0
        %v1735 = vmax.f32 %v1285, 0.0
        %v1736 = vmax.f32 %v1396, 0.0
        %v1737 = vmax.f32 %v1398, 0.0
        %v1738 = vmax.f32 %v1509, 0.0
        %v1739 = vmax.f32 %v1511, 0.0
        %v1740 = vmax.f32 %v1622, 0.0
        %v1741 = vmax.f32 %v1624, 0.0
        %v1742 = vmax.f32 %v1289, 0.0
        %v1743 = vmax.f32 %v1291, 0.0
        %v1744 = vmax.f32 %v1402, 0.0
        %v1745 = vmax.f32 %v1404, 0.0
        %v1746 = vmax.f32 %v1515, 0.0
        %v1747 = vmax.f32 %v1517, 0.0
        %v1748 = vmax.f32 %v1628, 0.0
        %v1749 = vmax.f32 %v1630, 0.0
        %v1750 = vmax.f32 %v1293, 0.0
        %v1751 = vmax.f32 %v1295, 0.0
        %v1752 = vmax.f32 %v1406, 0.0
        %v1753 = vmax.f32 %v1408, 0.0
        %v1754 = vmax.f32 %v1519, 0.0
        %v1755 = vmax.f32 %v1521, 0.0
        %v1756 = vmax.f32 %v1632, 0.0
        %v1757 = vmax.f32 %v1634, 0.0
        %v1758 = vmax.f32 %v1299, 0.0
        %v1759 = vmax.f32 %v1301, 0.0
        %v1760 = vmax.f32 %v1412, 0.0
        %v1761 = vmax.f32 %v1414, 0.0
        %v1762 = vmax.f32 %v1525, 0.0
        %v1763 = vmax.f32 %v1527, 0.0
        %v1764 = vmax.f32 %v1638, 0.0
        %v1765 = vmax.f32 %v1640, 0.0
        %v1766 = vmax.f32 %v1303, 0.0
        %v1767 = vmax.f32 %v1305, 0.0
        %v1768 = vmax.f32 %v1416, 0.0
        %v1769 = vmax.f32 %v1418, 0.0
        %v1770 = vmax.f32 %v1529, 0.0
        %v1771 = vmax.f32 %v1531, 0.0
        %v1772 = vmax.f32 %v1642, 0.0
        %v1773 = vmax.f32 %v1644, 0.0
        %v1774 = vpack.c.bf16 %v1654, %v1646
        %v1775 = vpack.c.bf16 %v1655, %v1647
        %v1776 = vpack.c.bf16 %v1656, %v1648
        %v1777 = vpack.c.bf16 %v1657, %v1649
        %v1778 = vpack.c.bf16 %v1658, %v1650
        %v1779 = vpack.c.bf16 %v1659, %v1651
        %v1780 = vpack.c.bf16 %v1660, %v1652
        %v1781 = vpack.c.bf16 %v1661, %v1653
        %v1782 = vpack.c.bf16 %v1670, %v1662
        %v1783 = vpack.c.bf16 %v1671, %v1663
        %v1784 = vpack.c.bf16 %v1672, %v1664
        %v1785 = vpack.c.bf16 %v1673, %v1665
        %v1786 = vpack.c.bf16 %v1674, %v1666
        %v1787 = vpack.c.bf16 %v1675, %v1667
        %v1788 = vpack.c.bf16 %v1676, %v1668
        %v1789 = vpack.c.bf16 %v1677, %v1669
        %v1790 = vpack.c.bf16 %v1686, %v1678
        %v1791 = vpack.c.bf16 %v1687, %v1679
        %v1792 = vpack.c.bf16 %v1688, %v1680
        %v1793 = vpack.c.bf16 %v1689, %v1681
        %v1794 = vpack.c.bf16 %v1690, %v1682
        %v1795 = vpack.c.bf16 %v1691, %v1683
        %v1796 = vpack.c.bf16 %v1692, %v1684
        %v1797 = vpack.c.bf16 %v1693, %v1685
        %v1798 = vpack.c.bf16 %v1702, %v1694
        %v1799 = vpack.c.bf16 %v1703, %v1695
        %v1800 = vpack.c.bf16 %v1704, %v1696
        %v1801 = vpack.c.bf16 %v1705, %v1697
        %v1802 = vpack.c.bf16 %v1706, %v1698
        %v1803 = vpack.c.bf16 %v1707, %v1699
        %v1804 = vpack.c.bf16 %v1708, %v1700
        %v1805 = vpack.c.bf16 %v1709, %v1701
        %v1806 = vpack.c.bf16 %v1718, %v1710
        %v1807 = vpack.c.bf16 %v1719, %v1711
        %v1808 = vpack.c.bf16 %v1720, %v1712
        %v1809 = vpack.c.bf16 %v1721, %v1713
        %v1810 = vpack.c.bf16 %v1722, %v1714
        %v1811 = vpack.c.bf16 %v1723, %v1715
        %v1812 = vpack.c.bf16 %v1724, %v1716
        %v1813 = vpack.c.bf16 %v1725, %v1717
        %v1814 = vpack.c.bf16 %v1734, %v1726
        %v1815 = vpack.c.bf16 %v1735, %v1727
        %v1816 = vpack.c.bf16 %v1736, %v1728
        %v1817 = vpack.c.bf16 %v1737, %v1729
        %v1818 = vpack.c.bf16 %v1738, %v1730
        %v1819 = vpack.c.bf16 %v1739, %v1731
        %v1820 = vpack.c.bf16 %v1740, %v1732
        %v1821 = vpack.c.bf16 %v1741, %v1733
        %v1822 = vpack.c.bf16 %v1750, %v1742
        %v1823 = vpack.c.bf16 %v1751, %v1743
        %v1824 = vpack.c.bf16 %v1752, %v1744
        %v1825 = vpack.c.bf16 %v1753, %v1745
        %v1826 = vpack.c.bf16 %v1754, %v1746
        %v1827 = vpack.c.bf16 %v1755, %v1747
        %v1828 = vpack.c.bf16 %v1756, %v1748
        %v1829 = vpack.c.bf16 %v1757, %v1749
        %v1830 = vpack.c.bf16 %v1766, %v1758
        %v1831 = vpack.c.bf16 %v1767, %v1759
        %v1832 = vpack.c.bf16 %v1768, %v1760
        %v1833 = vpack.c.bf16 %v1769, %v1761
        %v1834 = vpack.c.bf16 %v1770, %v1762
        %v1835 = vpack.c.bf16 %v1771, %v1763
        %v1836 = vpack.c.bf16 %v1772, %v1764
        %v1837 = vpack.c.bf16 %v1773, %v1765
        %v1838 = vld [vmem:[#allocation8] sm:$0xff]
        %v1839 = vld [vmem:[#allocation8 + $0x8] sm:$0xff]
        %v1840 = vld [vmem:[#allocation8 + $0x10] sm:$0xff]
        %v1841 = vld [vmem:[#allocation8 + $0x18] sm:$0xff]
        %v1842 = vld [vmem:[#allocation8 + $0x20] sm:$0xff]
        %v1843 = vld [vmem:[#allocation8 + $0x28] sm:$0xff]
        %v1844 = vld [vmem:[#allocation8 + $0x30] sm:$0xff]
        %v1845 = vld [vmem:[#allocation8 + $0x38] sm:$0xff]
        %v1846 = vld [vmem:[#allocation8 + $0x40] sm:$0xff]
        %v1847 = vld [vmem:[#allocation8 + $0x48] sm:$0xff]
        %v1848 = vld [vmem:[#allocation8 + $0x50] sm:$0xff]
        %v1849 = vld [vmem:[#allocation8 + $0x58] sm:$0xff]
        %v1850 = vld [vmem:[#allocation8 + $0x60] sm:$0xff]
        %v1851 = vld [vmem:[#allocation8 + $0x68] sm:$0xff]
        %v1852 = vld [vmem:[#allocation8 + $0x70] sm:$0xff]
        %v1853 = vld [vmem:[#allocation8 + $0x78] sm:$0xff]
        %v1854 = vld [vmem:[#allocation8 + $0x80] sm:$0xff]
        %v1855 = vld [vmem:[#allocation8 + $0x88] sm:$0xff]
        %v1856 = vld [vmem:[#allocation8 + $0x90] sm:$0xff]
        %v1857 = vld [vmem:[#allocation8 + $0x98] sm:$0xff]
        %v1858 = vld [vmem:[#allocation8 + $0xa0] sm:$0xff]
        %v1859 = vld [vmem:[#allocation8 + $0xa8] sm:$0xff]
        %v1860 = vld [vmem:[#allocation8 + $0xb0] sm:$0xff]
        %v1861 = vld [vmem:[#allocation8 + $0xb8] sm:$0xff]
        %v1862 = vld [vmem:[#allocation8 + $0xc0] sm:$0xff]
        %v1863 = vld [vmem:[#allocation8 + $0xc8] sm:$0xff]
        %v1864 = vld [vmem:[#allocation8 + $0xd0] sm:$0xff]
        %v1865 = vld [vmem:[#allocation8 + $0xd8] sm:$0xff]
        %v1866 = vld [vmem:[#allocation8 + $0xe0] sm:$0xff]
        %v1867 = vld [vmem:[#allocation8 + $0xe8] sm:$0xff]
        %v1868 = vld [vmem:[#allocation8 + $0xf0] sm:$0xff]
        %v1869 = vld [vmem:[#allocation8 + $0xf8] sm:$0xff]
        %v1870 = vld [vmem:[#allocation8 + $0x100] sm:$0xff]
        %v1871 = vld [vmem:[#allocation8 + $0x108] sm:$0xff]
        %v1872 = vld [vmem:[#allocation8 + $0x110] sm:$0xff]
        %v1873 = vld [vmem:[#allocation8 + $0x118] sm:$0xff]
        %v1874 = vld [vmem:[#allocation8 + $0x120] sm:$0xff]
        %v1875 = vld [vmem:[#allocation8 + $0x128] sm:$0xff]
        %v1876 = vld [vmem:[#allocation8 + $0x130] sm:$0xff]
        %v1877 = vld [vmem:[#allocation8 + $0x138] sm:$0xff]
        %v1878 = vld [vmem:[#allocation8 + $0x140] sm:$0xff]
        %v1879 = vld [vmem:[#allocation8 + $0x148] sm:$0xff]
        %v1880 = vld [vmem:[#allocation8 + $0x150] sm:$0xff]
        %v1881 = vld [vmem:[#allocation8 + $0x158] sm:$0xff]
        %v1882 = vld [vmem:[#allocation8 + $0x160] sm:$0xff]
        %v1883 = vld [vmem:[#allocation8 + $0x168] sm:$0xff]
        %v1884 = vld [vmem:[#allocation8 + $0x170] sm:$0xff]
        %v1885 = vld [vmem:[#allocation8 + $0x178] sm:$0xff]
        %v1886 = vld [vmem:[#allocation8 + $0x180] sm:$0xff]
        %v1887 = vld [vmem:[#allocation8 + $0x188] sm:$0xff]
        %v1888 = vld [vmem:[#allocation8 + $0x190] sm:$0xff]
        %v1889 = vld [vmem:[#allocation8 + $0x198] sm:$0xff]
        %v1890 = vld [vmem:[#allocation8 + $0x1a0] sm:$0xff]
        %v1891 = vld [vmem:[#allocation8 + $0x1a8] sm:$0xff]
        %v1892 = vld [vmem:[#allocation8 + $0x1b0] sm:$0xff]
        %v1893 = vld [vmem:[#allocation8 + $0x1b8] sm:$0xff]
        %v1894 = vld [vmem:[#allocation8 + $0x1c0] sm:$0xff]
        %v1895 = vld [vmem:[#allocation8 + $0x1c8] sm:$0xff]
        %v1896 = vld [vmem:[#allocation8 + $0x1d0] sm:$0xff]
        %v1897 = vld [vmem:[#allocation8 + $0x1d8] sm:$0xff]
        %v1898 = vld [vmem:[#allocation8 + $0x1e0] sm:$0xff]
        %v1899 = vld [vmem:[#allocation8 + $0x1e8] sm:$0xff]
        %v1900 = vld [vmem:[#allocation8 + $0x1f0] sm:$0xff]
        %v1901 = vld [vmem:[#allocation8 + $0x1f8] sm:$0xff]
        %v1902 = vld [vmem:[#allocation8 + $0x200] sm:$0xff]
        %v1903 = vld [vmem:[#allocation8 + $0x208] sm:$0xff]
        %v1904 = vld [vmem:[#allocation8 + $0x210] sm:$0xff]
        %v1905 = vld [vmem:[#allocation8 + $0x218] sm:$0xff]
        %v1906 = vld [vmem:[#allocation8 + $0x220] sm:$0xff]
        %v1907 = vld [vmem:[#allocation8 + $0x228] sm:$0xff]
        %v1908 = vld [vmem:[#allocation8 + $0x230] sm:$0xff]
        %v1909 = vld [vmem:[#allocation8 + $0x238] sm:$0xff]
        %v1910 = vld [vmem:[#allocation8 + $0x240] sm:$0xff]
        %v1911 = vld [vmem:[#allocation8 + $0x248] sm:$0xff]
        %v1912 = vld [vmem:[#allocation8 + $0x250] sm:$0xff]
        %v1913 = vld [vmem:[#allocation8 + $0x258] sm:$0xff]
        %v1914 = vld [vmem:[#allocation8 + $0x260] sm:$0xff]
        %v1915 = vld [vmem:[#allocation8 + $0x268] sm:$0xff]
        %v1916 = vld [vmem:[#allocation8 + $0x270] sm:$0xff]
        %v1917 = vld [vmem:[#allocation8 + $0x278] sm:$0xff]
        %v1918 = vld [vmem:[#allocation8 + $0x280] sm:$0xff]
        %v1919 = vld [vmem:[#allocation8 + $0x288] sm:$0xff]
        %v1920 = vld [vmem:[#allocation8 + $0x290] sm:$0xff]
        %v1921 = vld [vmem:[#allocation8 + $0x298] sm:$0xff]
        %v1922 = vld [vmem:[#allocation8 + $0x2a0] sm:$0xff]
        %v1923 = vld [vmem:[#allocation8 + $0x2a8] sm:$0xff]
        %v1924 = vld [vmem:[#allocation8 + $0x2b0] sm:$0xff]
        %v1925 = vld [vmem:[#allocation8 + $0x2b8] sm:$0xff]
        %v1926 = vld [vmem:[#allocation8 + $0x2c0] sm:$0xff]
        %v1927 = vld [vmem:[#allocation8 + $0x2c8] sm:$0xff]
        %v1928 = vld [vmem:[#allocation8 + $0x2d0] sm:$0xff]
        %v1929 = vld [vmem:[#allocation8 + $0x2d8] sm:$0xff]
        %v1930 = vld [vmem:[#allocation8 + $0x2e0] sm:$0xff]
        %v1931 = vld [vmem:[#allocation8 + $0x2e8] sm:$0xff]
        %v1932 = vld [vmem:[#allocation8 + $0x2f0] sm:$0xff]
        %v1933 = vld [vmem:[#allocation8 + $0x2f8] sm:$0xff]
        %v1934 = vld [vmem:[#allocation8 + $0x300] sm:$0xff]
        %v1935 = vld [vmem:[#allocation8 + $0x308] sm:$0xff]
        %v1936 = vld [vmem:[#allocation8 + $0x310] sm:$0xff]
        %v1937 = vld [vmem:[#allocation8 + $0x318] sm:$0xff]
        %v1938 = vld [vmem:[#allocation8 + $0x320] sm:$0xff]
        %v1939 = vld [vmem:[#allocation8 + $0x328] sm:$0xff]
        %v1940 = vld [vmem:[#allocation8 + $0x330] sm:$0xff]
        %v1941 = vld [vmem:[#allocation8 + $0x338] sm:$0xff]
        %v1942 = vld [vmem:[#allocation8 + $0x340] sm:$0xff]
        %v1943 = vld [vmem:[#allocation8 + $0x348] sm:$0xff]
        %v1944 = vld [vmem:[#allocation8 + $0x350] sm:$0xff]
        %v1945 = vld [vmem:[#allocation8 + $0x358] sm:$0xff]
        %v1946 = vld [vmem:[#allocation8 + $0x360] sm:$0xff]
        %v1947 = vld [vmem:[#allocation8 + $0x368] sm:$0xff]
        %v1948 = vld [vmem:[#allocation8 + $0x370] sm:$0xff]
        %v1949 = vld [vmem:[#allocation8 + $0x378] sm:$0xff]
        %v1950 = vld [vmem:[#allocation8 + $0x380] sm:$0xff]
        %v1951 = vld [vmem:[#allocation8 + $0x388] sm:$0xff]
        %v1952 = vld [vmem:[#allocation8 + $0x390] sm:$0xff]
        %v1953 = vld [vmem:[#allocation8 + $0x398] sm:$0xff]
        %v1954 = vld [vmem:[#allocation8 + $0x3a0] sm:$0xff]
        %v1955 = vld [vmem:[#allocation8 + $0x3a8] sm:$0xff]
        %v1956 = vld [vmem:[#allocation8 + $0x3b0] sm:$0xff]
        %v1957 = vld [vmem:[#allocation8 + $0x3b8] sm:$0xff]
        %v1958 = vld [vmem:[#allocation8 + $0x3c0] sm:$0xff]
        %v1959 = vld [vmem:[#allocation8 + $0x3c8] sm:$0xff]
        %v1960 = vld [vmem:[#allocation8 + $0x3d0] sm:$0xff]
        %v1961 = vld [vmem:[#allocation8 + $0x3d8] sm:$0xff]
        %v1962 = vld [vmem:[#allocation8 + $0x3e0] sm:$0xff]
        %v1963 = vld [vmem:[#allocation8 + $0x3e8] sm:$0xff]
        %v1964 = vld [vmem:[#allocation8 + $0x3f0] sm:$0xff]
        %v1965 = vld [vmem:[#allocation8 + $0x3f8] sm:$0xff]
        %v1966 = vld [vmem:[%s4] sm:$0x3]
        %v1968 = vlaneseq
        %v1969 = vshrl.u32 %v1968, 7
        %v1970 = vsub.s32 0, %v1969
        %v1971 = vrot.slane %v1966, %v1970
        %v1972 = vlaneseq
        %v1973 = vshrl.u32 %v1972, 7
        %v1974 = vsub.s32 1, %v1973
        %v1975 = vrot.slane %v1966, %v1974
        %v2106 = vunpack.c.l.b16 %v1838
        %v2107 = vunpack.c.h.b16 %v1838
        %v2108 = vunpack.c.l.b16 %v1839
        %v2109 = vunpack.c.h.b16 %v1839
        %v2110 = vunpack.c.l.b16 %v1840
        %v2111 = vunpack.c.h.b16 %v1840
        %v2112 = vunpack.c.l.b16 %v1841
        %v2113 = vunpack.c.h.b16 %v1841
        %v2114 = vunpack.c.l.b16 %v1842
        %v2115 = vunpack.c.h.b16 %v1842
        %v2116 = vunpack.c.l.b16 %v1843
        %v2117 = vunpack.c.h.b16 %v1843
        %v2118 = vunpack.c.l.b16 %v1844
        %v2119 = vunpack.c.h.b16 %v1844
        %v2120 = vunpack.c.l.b16 %v1845
        %v2121 = vunpack.c.h.b16 %v1845
        %v2122 = vunpack.c.l.b16 %v1846
        %v2123 = vunpack.c.h.b16 %v1846
        %v2124 = vunpack.c.l.b16 %v1847
        %v2125 = vunpack.c.h.b16 %v1847
        %v2126 = vunpack.c.l.b16 %v1848
        %v2127 = vunpack.c.h.b16 %v1848
        %v2128 = vunpack.c.l.b16 %v1849
        %v2129 = vunpack.c.h.b16 %v1849
        %v2130 = vunpack.c.l.b16 %v1850
        %v2131 = vunpack.c.h.b16 %v1850
        %v2132 = vunpack.c.l.b16 %v1851
        %v2133 = vunpack.c.h.b16 %v1851
        %v2134 = vunpack.c.l.b16 %v1852
        %v2135 = vunpack.c.h.b16 %v1852
        %v2136 = vunpack.c.l.b16 %v1853
        %v2137 = vunpack.c.h.b16 %v1853
        %v2138 = vunpack.c.l.b16 %v1854
        %v2139 = vunpack.c.h.b16 %v1854
        %v2140 = vunpack.c.l.b16 %v1855
        %v2141 = vunpack.c.h.b16 %v1855
        %v2142 = vunpack.c.l.b16 %v1856
        %v2143 = vunpack.c.h.b16 %v1856
        %v2144 = vunpack.c.l.b16 %v1857
        %v2145 = vunpack.c.h.b16 %v1857
        %v2146 = vunpack.c.l.b16 %v1858
        %v2147 = vunpack.c.h.b16 %v1858
        %v2148 = vunpack.c.l.b16 %v1859
        %v2149 = vunpack.c.h.b16 %v1859
        %v2150 = vunpack.c.l.b16 %v1860
        %v2151 = vunpack.c.h.b16 %v1860
        %v2152 = vunpack.c.l.b16 %v1861
        %v2153 = vunpack.c.h.b16 %v1861
        %v2154 = vunpack.c.l.b16 %v1862
        %v2155 = vunpack.c.h.b16 %v1862
        %v2156 = vunpack.c.l.b16 %v1863
        %v2157 = vunpack.c.h.b16 %v1863
        %v2158 = vunpack.c.l.b16 %v1864
        %v2159 = vunpack.c.h.b16 %v1864
        %v2160 = vunpack.c.l.b16 %v1865
        %v2161 = vunpack.c.h.b16 %v1865
        %v2162 = vunpack.c.l.b16 %v1866
        %v2163 = vunpack.c.h.b16 %v1866
        %v2164 = vunpack.c.l.b16 %v1867
        %v2165 = vunpack.c.h.b16 %v1867
        %v2166 = vunpack.c.l.b16 %v1868
        %v2167 = vunpack.c.h.b16 %v1868
        %v2168 = vunpack.c.l.b16 %v1869
        %v2169 = vunpack.c.h.b16 %v1869
        %v2170 = vunpack.c.l.b16 %v1870
        %v2171 = vunpack.c.h.b16 %v1870
        %v2172 = vunpack.c.l.b16 %v1871
        %v2173 = vunpack.c.h.b16 %v1871
        %v2174 = vunpack.c.l.b16 %v1872
        %v2175 = vunpack.c.h.b16 %v1872
        %v2176 = vunpack.c.l.b16 %v1873
        %v2177 = vunpack.c.h.b16 %v1873
        %v2178 = vunpack.c.l.b16 %v1874
        %v2179 = vunpack.c.h.b16 %v1874
        %v2180 = vunpack.c.l.b16 %v1875
        %v2181 = vunpack.c.h.b16 %v1875
        %v2182 = vunpack.c.l.b16 %v1876
        %v2183 = vunpack.c.h.b16 %v1876
        %v2184 = vunpack.c.l.b16 %v1877
        %v2185 = vunpack.c.h.b16 %v1877
        %v2186 = vunpack.c.l.b16 %v1878
        %v2187 = vunpack.c.h.b16 %v1878
        %v2188 = vunpack.c.l.b16 %v1879
        %v2189 = vunpack.c.h.b16 %v1879
        %v2190 = vunpack.c.l.b16 %v1880
        %v2191 = vunpack.c.h.b16 %v1880
        %v2192 = vunpack.c.l.b16 %v1881
        %v2193 = vunpack.c.h.b16 %v1881
        %v2194 = vunpack.c.l.b16 %v1882
        %v2195 = vunpack.c.h.b16 %v1882
        %v2196 = vunpack.c.l.b16 %v1883
        %v2197 = vunpack.c.h.b16 %v1883
        %v2198 = vunpack.c.l.b16 %v1884
        %v2199 = vunpack.c.h.b16 %v1884
        %v2200 = vunpack.c.l.b16 %v1885
        %v2201 = vunpack.c.h.b16 %v1885
        %v2202 = vunpack.c.l.b16 %v1886
        %v2203 = vunpack.c.h.b16 %v1886
        %v2204 = vunpack.c.l.b16 %v1887
        %v2205 = vunpack.c.h.b16 %v1887
        %v2206 = vunpack.c.l.b16 %v1888
        %v2207 = vunpack.c.h.b16 %v1888
        %v2208 = vunpack.c.l.b16 %v1889
        %v2209 = vunpack.c.h.b16 %v1889
        %v2210 = vunpack.c.l.b16 %v1890
        %v2211 = vunpack.c.h.b16 %v1890
        %v2212 = vunpack.c.l.b16 %v1891
        %v2213 = vunpack.c.h.b16 %v1891
        %v2214 = vunpack.c.l.b16 %v1892
        %v2215 = vunpack.c.h.b16 %v1892
        %v2216 = vunpack.c.l.b16 %v1893
        %v2217 = vunpack.c.h.b16 %v1893
        %v2218 = vunpack.c.l.b16 %v1894
        %v2219 = vunpack.c.h.b16 %v1894
        %v2220 = vunpack.c.l.b16 %v1895
        %v2221 = vunpack.c.h.b16 %v1895
        %v2222 = vunpack.c.l.b16 %v1896
        %v2223 = vunpack.c.h.b16 %v1896
        %v2224 = vunpack.c.l.b16 %v1897
        %v2225 = vunpack.c.h.b16 %v1897
        %v2226 = vunpack.c.l.b16 %v1898
        %v2227 = vunpack.c.h.b16 %v1898
        %v2228 = vunpack.c.l.b16 %v1899
        %v2229 = vunpack.c.h.b16 %v1899
        %v2230 = vunpack.c.l.b16 %v1900
        %v2231 = vunpack.c.h.b16 %v1900
        %v2232 = vunpack.c.l.b16 %v1901
        %v2233 = vunpack.c.h.b16 %v1901
        %v2234 = vunpack.c.l.b16 %v1902
        %v2235 = vunpack.c.h.b16 %v1902
        %v2236 = vunpack.c.l.b16 %v1903
        %v2237 = vunpack.c.h.b16 %v1903
        %v2238 = vunpack.c.l.b16 %v1904
        %v2239 = vunpack.c.h.b16 %v1904
        %v2240 = vunpack.c.l.b16 %v1905
        %v2241 = vunpack.c.h.b16 %v1905
        %v2242 = vunpack.c.l.b16 %v1906
        %v2243 = vunpack.c.h.b16 %v1906
        %v2244 = vunpack.c.l.b16 %v1907
        %v2245 = vunpack.c.h.b16 %v1907
        %v2246 = vunpack.c.l.b16 %v1908
        %v2247 = vunpack.c.h.b16 %v1908
        %v2248 = vunpack.c.l.b16 %v1909
        %v2249 = vunpack.c.h.b16 %v1909
        %v2250 = vunpack.c.l.b16 %v1910
        %v2251 = vunpack.c.h.b16 %v1910
        %v2252 = vunpack.c.l.b16 %v1911
        %v2253 = vunpack.c.h.b16 %v1911
        %v2254 = vunpack.c.l.b16 %v1912
        %v2255 = vunpack.c.h.b16 %v1912
        %v2256 = vunpack.c.l.b16 %v1913
        %v2257 = vunpack.c.h.b16 %v1913
        %v2258 = vunpack.c.l.b16 %v1914
        %v2259 = vunpack.c.h.b16 %v1914
        %v2260 = vunpack.c.l.b16 %v1915
        %v2261 = vunpack.c.h.b16 %v1915
        %v2262 = vunpack.c.l.b16 %v1916
        %v2263 = vunpack.c.h.b16 %v1916
        %v2264 = vunpack.c.l.b16 %v1917
        %v2265 = vunpack.c.h.b16 %v1917
        %v2266 = vunpack.c.l.b16 %v1918
        %v2267 = vunpack.c.h.b16 %v1918
        %v2268 = vunpack.c.l.b16 %v1919
        %v2269 = vunpack.c.h.b16 %v1919
        %v2270 = vunpack.c.l.b16 %v1920
        %v2271 = vunpack.c.h.b16 %v1920
        %v2272 = vunpack.c.l.b16 %v1921
        %v2273 = vunpack.c.h.b16 %v1921
        %v2274 = vunpack.c.l.b16 %v1922
        %v2275 = vunpack.c.h.b16 %v1922
        %v2276 = vunpack.c.l.b16 %v1923
        %v2277 = vunpack.c.h.b16 %v1923
        %v2278 = vunpack.c.l.b16 %v1924
        %v2279 = vunpack.c.h.b16 %v1924
        %v2280 = vunpack.c.l.b16 %v1925
        %v2281 = vunpack.c.h.b16 %v1925
        %v2282 = vunpack.c.l.b16 %v1926
        %v2283 = vunpack.c.h.b16 %v1926
        %v2284 = vunpack.c.l.b16 %v1927
        %v2285 = vunpack.c.h.b16 %v1927
        %v2286 = vunpack.c.l.b16 %v1928
        %v2287 = vunpack.c.h.b16 %v1928
        %v2288 = vunpack.c.l.b16 %v1929
        %v2289 = vunpack.c.h.b16 %v1929
        %v2290 = vunpack.c.l.b16 %v1930
        %v2291 = vunpack.c.h.b16 %v1930
        %v2292 = vunpack.c.l.b16 %v1931
        %v2293 = vunpack.c.h.b16 %v1931
        %v2294 = vunpack.c.l.b16 %v1932
        %v2295 = vunpack.c.h.b16 %v1932
        %v2296 = vunpack.c.l.b16 %v1933
        %v2297 = vunpack.c.h.b16 %v1933
        %v2298 = vunpack.c.l.b16 %v1934
        %v2299 = vunpack.c.h.b16 %v1934
        %v2300 = vunpack.c.l.b16 %v1935
        %v2301 = vunpack.c.h.b16 %v1935
        %v2302 = vunpack.c.l.b16 %v1936
        %v2303 = vunpack.c.h.b16 %v1936
        %v2304 = vunpack.c.l.b16 %v1937
        %v2305 = vunpack.c.h.b16 %v1937
        %v2306 = vunpack.c.l.b16 %v1938
        %v2307 = vunpack.c.h.b16 %v1938
        %v2308 = vunpack.c.l.b16 %v1939
        %v2309 = vunpack.c.h.b16 %v1939
        %v2310 = vunpack.c.l.b16 %v1940
        %v2311 = vunpack.c.h.b16 %v1940
        %v2312 = vunpack.c.l.b16 %v1941
        %v2313 = vunpack.c.h.b16 %v1941
        %v2314 = vunpack.c.l.b16 %v1942
        %v2315 = vunpack.c.h.b16 %v1942
        %v2316 = vunpack.c.l.b16 %v1943
        %v2317 = vunpack.c.h.b16 %v1943
        %v2318 = vunpack.c.l.b16 %v1944
        %v2319 = vunpack.c.h.b16 %v1944
        %v2320 = vunpack.c.l.b16 %v1945
        %v2321 = vunpack.c.h.b16 %v1945
        %v2322 = vunpack.c.l.b16 %v1946
        %v2323 = vunpack.c.h.b16 %v1946
        %v2324 = vunpack.c.l.b16 %v1947
        %v2325 = vunpack.c.h.b16 %v1947
        %v2326 = vunpack.c.l.b16 %v1948
        %v2327 = vunpack.c.h.b16 %v1948
        %v2328 = vunpack.c.l.b16 %v1949
        %v2329 = vunpack.c.h.b16 %v1949
        %v2330 = vunpack.c.l.b16 %v1950
        %v2331 = vunpack.c.h.b16 %v1950
        %v2332 = vunpack.c.l.b16 %v1951
        %v2333 = vunpack.c.h.b16 %v1951
        %v2334 = vunpack.c.l.b16 %v1952
        %v2335 = vunpack.c.h.b16 %v1952
        %v2336 = vunpack.c.l.b16 %v1953
        %v2337 = vunpack.c.h.b16 %v1953
        %v2338 = vunpack.c.l.b16 %v1954
        %v2339 = vunpack.c.h.b16 %v1954
        %v2340 = vunpack.c.l.b16 %v1955
        %v2341 = vunpack.c.h.b16 %v1955
        %v2342 = vunpack.c.l.b16 %v1956
        %v2343 = vunpack.c.h.b16 %v1956
        %v2344 = vunpack.c.l.b16 %v1957
        %v2345 = vunpack.c.h.b16 %v1957
        %v2346 = vunpack.c.l.b16 %v1958
        %v2347 = vunpack.c.h.b16 %v1958
        %v2348 = vunpack.c.l.b16 %v1959
        %v2349 = vunpack.c.h.b16 %v1959
        %v2350 = vunpack.c.l.b16 %v1960
        %v2351 = vunpack.c.h.b16 %v1960
        %v2352 = vunpack.c.l.b16 %v1961
        %v2353 = vunpack.c.h.b16 %v1961
        %v2354 = vunpack.c.l.b16 %v1962
        %v2355 = vunpack.c.h.b16 %v1962
        %v2356 = vunpack.c.l.b16 %v1963
        %v2357 = vunpack.c.h.b16 %v1963
        %v2358 = vunpack.c.l.b16 %v1964
        %v2359 = vunpack.c.h.b16 %v1964
        %v2360 = vunpack.c.l.b16 %v1965
        %v2361 = vunpack.c.h.b16 %v1965
        %v2362 = vpack.c.b16 %v2108, %v2106
        %v2363 = vpack.c.b16 %v2109, %v2107
        %v2364 = vpack.c.b16 %v2112, %v2110
        %v2365 = vpack.c.b16 %v2113, %v2111
        %v2366 = vpack.c.b16 %v2116, %v2114
        %v2367 = vpack.c.b16 %v2117, %v2115
        %v2368 = vpack.c.b16 %v2120, %v2118
        %v2369 = vpack.c.b16 %v2121, %v2119
        %v2370 = vpack.c.b16 %v2124, %v2122
        %v2371 = vpack.c.b16 %v2125, %v2123
        %v2372 = vpack.c.b16 %v2128, %v2126
        %v2373 = vpack.c.b16 %v2129, %v2127
        %v2374 = vpack.c.b16 %v2132, %v2130
        %v2375 = vpack.c.b16 %v2133, %v2131
        %v2376 = vpack.c.b16 %v2136, %v2134
        %v2377 = vpack.c.b16 %v2137, %v2135
        %v2378 = vpack.c.b16 %v2140, %v2138
        %v2379 = vpack.c.b16 %v2141, %v2139
        %v2380 = vpack.c.b16 %v2144, %v2142
        %v2381 = vpack.c.b16 %v2145, %v2143
        %v2382 = vpack.c.b16 %v2148, %v2146
        %v2383 = vpack.c.b16 %v2149, %v2147
        %v2384 = vpack.c.b16 %v2152, %v2150
        %v2385 = vpack.c.b16 %v2153, %v2151
        %v2386 = vpack.c.b16 %v2156, %v2154
        %v2387 = vpack.c.b16 %v2157, %v2155
        %v2388 = vpack.c.b16 %v2160, %v2158
        %v2389 = vpack.c.b16 %v2161, %v2159
        %v2390 = vpack.c.b16 %v2164, %v2162
        %v2391 = vpack.c.b16 %v2165, %v2163
        %v2392 = vpack.c.b16 %v2168, %v2166
        %v2393 = vpack.c.b16 %v2169, %v2167
        %v2394 = vpack.c.b16 %v2172, %v2170
        %v2395 = vpack.c.b16 %v2173, %v2171
        %v2396 = vpack.c.b16 %v2176, %v2174
        %v2397 = vpack.c.b16 %v2177, %v2175
        %v2398 = vpack.c.b16 %v2180, %v2178
        %v2399 = vpack.c.b16 %v2181, %v2179
        %v2400 = vpack.c.b16 %v2184, %v2182
        %v2401 = vpack.c.b16 %v2185, %v2183
        %v2402 = vpack.c.b16 %v2188, %v2186
        %v2403 = vpack.c.b16 %v2189, %v2187
        %v2404 = vpack.c.b16 %v2192, %v2190
        %v2405 = vpack.c.b16 %v2193, %v2191
        %v2406 = vpack.c.b16 %v2196, %v2194
        %v2407 = vpack.c.b16 %v2197, %v2195
        %v2408 = vpack.c.b16 %v2200, %v2198
        %v2409 = vpack.c.b16 %v2201, %v2199
        %v2410 = vpack.c.b16 %v2204, %v2202
        %v2411 = vpack.c.b16 %v2205, %v2203
        %v2412 = vpack.c.b16 %v2208, %v2206
        %v2413 = vpack.c.b16 %v2209, %v2207
        %v2414 = vpack.c.b16 %v2212, %v2210
        %v2415 = vpack.c.b16 %v2213, %v2211
        %v2416 = vpack.c.b16 %v2216, %v2214
        %v2417 = vpack.c.b16 %v2217, %v2215
        %v2418 = vpack.c.b16 %v2220, %v2218
        %v2419 = vpack.c.b16 %v2221, %v2219
        %v2420 = vpack.c.b16 %v2224, %v2222
        %v2421 = vpack.c.b16 %v2225, %v2223
        %v2422 = vpack.c.b16 %v2228, %v2226
        %v2423 = vpack.c.b16 %v2229, %v2227
        %v2424 = vpack.c.b16 %v2232, %v2230
        %v2425 = vpack.c.b16 %v2233, %v2231
        %v2426 = vpack.c.b16 %v2236, %v2234
        %v2427 = vpack.c.b16 %v2237, %v2235
        %v2428 = vpack.c.b16 %v2240, %v2238
        %v2429 = vpack.c.b16 %v2241, %v2239
        %v2430 = vpack.c.b16 %v2244, %v2242
        %v2431 = vpack.c.b16 %v2245, %v2243
        %v2432 = vpack.c.b16 %v2248, %v2246
        %v2433 = vpack.c.b16 %v2249, %v2247
        %v2434 = vpack.c.b16 %v2252, %v2250
        %v2435 = vpack.c.b16 %v2253, %v2251
        %v2436 = vpack.c.b16 %v2256, %v2254
        %v2437 = vpack.c.b16 %v2257, %v2255
        %v2438 = vpack.c.b16 %v2260, %v2258
        %v2439 = vpack.c.b16 %v2261, %v2259
        %v2440 = vpack.c.b16 %v2264, %v2262
        %v2441 = vpack.c.b16 %v2265, %v2263
        %v2442 = vpack.c.b16 %v2268, %v2266
        %v2443 = vpack.c.b16 %v2269, %v2267
        %v2444 = vpack.c.b16 %v2272, %v2270
        %v2445 = vpack.c.b16 %v2273, %v2271
        %v2446 = vpack.c.b16 %v2276, %v2274
        %v2447 = vpack.c.b16 %v2277, %v2275
        %v2448 = vpack.c.b16 %v2280, %v2278
        %v2449 = vpack.c.b16 %v2281, %v2279
        %v2450 = vpack.c.b16 %v2284, %v2282
        %v2451 = vpack.c.b16 %v2285, %v2283
        %v2452 = vpack.c.b16 %v2288, %v2286
        %v2453 = vpack.c.b16 %v2289, %v2287
        %v2454 = vpack.c.b16 %v2292, %v2290
        %v2455 = vpack.c.b16 %v2293, %v2291
        %v2456 = vpack.c.b16 %v2296, %v2294
        %v2457 = vpack.c.b16 %v2297, %v2295
        %v2458 = vpack.c.b16 %v2300, %v2298
        %v2459 = vpack.c.b16 %v2301, %v2299
        %v2460 = vpack.c.b16 %v2304, %v2302
        %v2461 = vpack.c.b16 %v2305, %v2303
        %v2462 = vpack.c.b16 %v2308, %v2306
        %v2463 = vpack.c.b16 %v2309, %v2307
        %v2464 = vpack.c.b16 %v2312, %v2310
        %v2465 = vpack.c.b16 %v2313, %v2311
        %v2466 = vpack.c.b16 %v2316, %v2314
        %v2467 = vpack.c.b16 %v2317, %v2315
        %v2468 = vpack.c.b16 %v2320, %v2318
        %v2469 = vpack.c.b16 %v2321, %v2319
        %v2470 = vpack.c.b16 %v2324, %v2322
        %v2471 = vpack.c.b16 %v2325, %v2323
        %v2472 = vpack.c.b16 %v2328, %v2326
        %v2473 = vpack.c.b16 %v2329, %v2327
        %v2474 = vpack.c.b16 %v2332, %v2330
        %v2475 = vpack.c.b16 %v2333, %v2331
        %v2476 = vpack.c.b16 %v2336, %v2334
        %v2477 = vpack.c.b16 %v2337, %v2335
        %v2478 = vpack.c.b16 %v2340, %v2338
        %v2479 = vpack.c.b16 %v2341, %v2339
        %v2480 = vpack.c.b16 %v2344, %v2342
        %v2481 = vpack.c.b16 %v2345, %v2343
        %v2482 = vpack.c.b16 %v2348, %v2346
        %v2483 = vpack.c.b16 %v2349, %v2347
        %v2484 = vpack.c.b16 %v2352, %v2350
        %v2485 = vpack.c.b16 %v2353, %v2351
        %v2486 = vpack.c.b16 %v2356, %v2354
        %v2487 = vpack.c.b16 %v2357, %v2355
        %v2488 = vpack.c.b16 %v2360, %v2358
        %v2489 = vpack.c.b16 %v2361, %v2359
        %2618 = vmatprep.subr.bf16.mxu0 %v2363
        %2619 = vmatpush1.bf16.msra.mxu0 %v2362
        %2620 = vmatprep.subr.bf16.mxu0 %v2365
        %2621 = vmatpush1.bf16.msra.mxu0 %v2364
        %2622 = vmatprep.subr.bf16.mxu0 %v2367
        %2623 = vmatpush1.bf16.msra.mxu0 %v2366
        %2624 = vmatprep.subr.bf16.mxu0 %v2369
        %2625 = vmatpush1.bf16.msra.mxu0 %v2368
        %2626 = vmatprep.subr.bf16.mxu0 %v2371
        %2627 = vmatpush1.bf16.msra.mxu0 %v2370
        %2628 = vmatprep.subr.bf16.mxu0 %v2373
        %2629 = vmatpush1.bf16.msra.mxu0 %v2372
        %2630 = vmatprep.subr.bf16.mxu0 %v2375
        %2631 = vmatpush1.bf16.msra.mxu0 %v2374
        %2632 = vmatprep.subr.bf16.mxu0 %v2377
        %2633 = vmatpush1.bf16.msra.mxu0 %v2376
        %2634 = vmatprep.subr.bf16.mxu0 %v2379
        %2635 = vmatpush1.bf16.msra.mxu0 %v2378
        %2636 = vmatprep.subr.bf16.mxu0 %v2381
        %2637 = vmatpush1.bf16.msra.mxu0 %v2380
        %2638 = vmatprep.subr.bf16.mxu0 %v2383
        %2639 = vmatpush1.bf16.msra.mxu0 %v2382
        %2640 = vmatprep.subr.bf16.mxu0 %v2385
        %2641 = vmatpush1.bf16.msra.mxu0 %v2384
        %2642 = vmatprep.subr.bf16.mxu0 %v2387
        %2643 = vmatpush1.bf16.msra.mxu0 %v2386
        %2644 = vmatprep.subr.bf16.mxu0 %v2389
        %2645 = vmatpush1.bf16.msra.mxu0 %v2388
        %2646 = vmatprep.subr.bf16.mxu0 %v2391
        %2647 = vmatpush1.bf16.msra.mxu0 %v2390
        %2648 = vmatprep.subr.bf16.mxu0 %v2393
        %2649 = vmatpush1.bf16.msra.mxu0 %v2392
        %2650 = vmatprep.mubr.bf16.mxu0 %v1775
        %2651 = vmatmul.mubr.bf16.gmra.mrb[0].mxu0 %v1774
        %v2652 = vpop.f32.mrb[0].mxu0
        %v2653 = vadd.f32 %v1971, %v2652
        %v2654 = vpop.f32.mrb[0].mxu0
        %v2655 = vadd.f32 %v1975, %v2654
        %v2656 = vpop.f32.mrb[0].mxu0
        %v2657 = vadd.f32 %v1971, %v2656
        %v2658 = vpop.f32.mrb[0].mxu0
        %v2659 = vadd.f32 %v1975, %v2658
        %2660 = vmatprep.mubr.bf16.mxu0 %v1783
        %2661 = vmatmul.mubr.bf16.gmra.mrb[0].mxu0 %v1782
        %v2662 = vpop.f32.mrb[0].mxu0
        %v2663 = vadd.f32 %v1971, %v2662
        %v2664 = vpop.f32.mrb[0].mxu0
        %v2665 = vadd.f32 %v1975, %v2664
        %v2666 = vpop.f32.mrb[0].mxu0
        %v2667 = vadd.f32 %v1971, %v2666
        %v2668 = vpop.f32.mrb[0].mxu0
        %v2669 = vadd.f32 %v1975, %v2668
        %2670 = vmatprep.mubr.bf16.mxu0 %v1791
        %2671 = vmatmul.mubr.bf16.gmra.mrb[0].mxu0 %v1790
        %v2672 = vpop.f32.mrb[0].mxu0
        %v2673 = vadd.f32 %v1971, %v2672
        %v2674 = vpop.f32.mrb[0].mxu0
        %v2675 = vadd.f32 %v1975, %v2674
        %v2676 = vpop.f32.mrb[0].mxu0
        %v2677 = vadd.f32 %v1971, %v2676
        %v2678 = vpop.f32.mrb[0].mxu0
        %v2679 = vadd.f32 %v1975, %v2678
        %2680 = vmatprep.mubr.bf16.mxu0 %v1799
        %2681 = vmatmul.mubr.bf16.gmra.mrb[0].mxu0 %v1798
        %v2682 = vpop.f32.mrb[0].mxu0
        %v2683 = vadd.f32 %v1971, %v2682
        %v2684 = vpop.f32.mrb[0].mxu0
        %v2685 = vadd.f32 %v1975, %v2684
        %v2686 = vpop.f32.mrb[0].mxu0
        %v2687 = vadd.f32 %v1971, %v2686
        %v2688 = vpop.f32.mrb[0].mxu0
        %v2689 = vadd.f32 %v1975, %v2688
        %2690 = vmatprep.mubr.bf16.mxu0 %v1807
        %2691 = vmatmul.mubr.bf16.gmra.mrb[0].mxu0 %v1806
        %v2692 = vpop.f32.mrb[0].mxu0
        %v2693 = vadd.f32 %v1971, %v2692
        %v2694 = vpop.f32.mrb[0].mxu0
        %v2695 = vadd.f32 %v1975, %v2694
        %v2696 = vpop.f32.mrb[0].mxu0
        %v2697 = vadd.f32 %v1971, %v2696
        %v2698 = vpop.f32.mrb[0].mxu0
        %v2699 = vadd.f32 %v1975, %v2698
        %2700 = vmatprep.mubr.bf16.mxu0 %v1815
        %2701 = vmatmul.mubr.bf16.gmra.mrb[0].mxu0 %v1814
        %v2702 = vpop.f32.mrb[0].mxu0
        %v2703 = vadd.f32 %v1971, %v2702
        %v2704 = vpop.f32.mrb[0].mxu0
        %v2705 = vadd.f32 %v1975, %v2704
        %v2706 = vpop.f32.mrb[0].mxu0
        %v2707 = vadd.f32 %v1971, %v2706
        %v2708 = vpop.f32.mrb[0].mxu0
        %v2709 = vadd.f32 %v1975, %v2708
        %2710 = vmatprep.mubr.bf16.mxu0 %v1823
        %2711 = vmatmul.mubr.bf16.gmra.mrb[0].mxu0 %v1822
        %v2712 = vpop.f32.mrb[0].mxu0
        %v2713 = vadd.f32 %v1971, %v2712
        %v2714 = vpop.f32.mrb[0].mxu0
        %v2715 = vadd.f32 %v1975, %v2714
        %v2716 = vpop.f32.mrb[0].mxu0
        %v2717 = vadd.f32 %v1971, %v2716
        %v2718 = vpop.f32.mrb[0].mxu0
        %v2719 = vadd.f32 %v1975, %v2718
        %2720 = vmatprep.mubr.bf16.mxu0 %v1831
        %2721 = vmatmul.mubr.bf16.gmra.mrb[0].mxu0 %v1830
        %v2722 = vpop.f32.mrb[0].mxu0
        %v2723 = vadd.f32 %v1971, %v2722
        %v2724 = vpop.f32.mrb[0].mxu0
        %v2725 = vadd.f32 %v1975, %v2724
        %v2726 = vpop.f32.mrb[0].mxu0
        %v2727 = vadd.f32 %v1971, %v2726
        %v2728 = vpop.f32.mrb[0].mxu0
        %v2729 = vadd.f32 %v1975, %v2728
        %2730 = vdwg.mxu0
        %2731 = vmatprep.subr.bf16.mxu0 %v2395
        %2732 = vmatpush1.bf16.msra.mxu0 %v2394
        %2733 = vmatprep.subr.bf16.mxu0 %v2397
        %2734 = vmatpush1.bf16.msra.mxu0 %v2396
        %2735 = vmatprep.subr.bf16.mxu0 %v2399
        %2736 = vmatpush1.bf16.msra.mxu0 %v2398
        %2737 = vmatprep.subr.bf16.mxu0 %v2401
        %2738 = vmatpush1.bf16.msra.mxu0 %v2400
        %2739 = vmatprep.subr.bf16.mxu0 %v2403
        %2740 = vmatpush1.bf16.msra.mxu0 %v2402
        %2741 = vmatprep.subr.bf16.mxu0 %v2405
        %2742 = vmatpush1.bf16.msra.mxu0 %v2404
        %2743 = vmatprep.subr.bf16.mxu0 %v2407
        %2744 = vmatpush1.bf16.msra.mxu0 %v2406
        %2745 = vmatprep.subr.bf16.mxu0 %v2409
        %2746 = vmatpush1.bf16.msra.mxu0 %v2408
        %2747 = vmatprep.subr.bf16.mxu0 %v2411
        %2748 = vmatpush1.bf16.msra.mxu0 %v2410
        %2749 = vmatprep.subr.bf16.mxu0 %v2413
        %2750 = vmatpush1.bf16.msra.mxu0 %v2412
        %2751 = vmatprep.subr.bf16.mxu0 %v2415
        %2752 = vmatpush1.bf16.msra.mxu0 %v2414
        %2753 = vmatprep.subr.bf16.mxu0 %v2417
        %2754 = vmatpush1.bf16.msra.mxu0 %v2416
        %2755 = vmatprep.subr.bf16.mxu0 %v2419
        %2756 = vmatpush1.bf16.msra.mxu0 %v2418
        %2757 = vmatprep.subr.bf16.mxu0 %v2421
        %2758 = vmatpush1.bf16.msra.mxu0 %v2420
        %2759 = vmatprep.subr.bf16.mxu0 %v2423
        %2760 = vmatpush1.bf16.msra.mxu0 %v2422
        %2761 = vmatprep.subr.bf16.mxu0 %v2425
        %2762 = vmatpush1.bf16.msra.mxu0 %v2424
        %2763 = vmatprep.mubr.bf16.mxu0 %v1777
        %2764 = vmatmul.mubr.bf16.gmra.mrb[0].mxu0 %v1776
        %v2765 = vpop.f32.mrb[0].mxu0
        %v2766 = vadd.f32 %v2653, %v2765
        %v2767 = vpop.f32.mrb[0].mxu0
        %v2768 = vadd.f32 %v2655, %v2767
        %v2769 = vpop.f32.mrb[0].mxu0
        %v2770 = vadd.f32 %v2657, %v2769
        %v2771 = vpop.f32.mrb[0].mxu0
        %v2772 = vadd.f32 %v2659, %v2771
        %2773 = vmatprep.mubr.bf16.mxu0 %v1785
        %2774 = vmatmul.mubr.bf16.gmra.mrb[0].mxu0 %v1784
        %v2775 = vpop.f32.mrb[0].mxu0
        %v2776 = vadd.f32 %v2663, %v2775
        %v2777 = vpop.f32.mrb[0].mxu0
        %v2778 = vadd.f32 %v2665, %v2777
        %v2779 = vpop.f32.mrb[0].mxu0
        %v2780 = vadd.f32 %v2667, %v2779
        %v2781 = vpop.f32.mrb[0].mxu0
        %v2782 = vadd.f32 %v2669, %v2781
        %2783 = vmatprep.mubr.bf16.mxu0 %v1793
        %2784 = vmatmul.mubr.bf16.gmra.mrb[0].mxu0 %v1792
        %v2785 = vpop.f32.mrb[0].mxu0
        %v2786 = vadd.f32 %v2673, %v2785
        %v2787 = vpop.f32.mrb[0].mxu0
        %v2788 = vadd.f32 %v2675, %v2787
        %v2789 = vpop.f32.mrb[0].mxu0
        %v2790 = vadd.f32 %v2677, %v2789
        %v2791 = vpop.f32.mrb[0].mxu0
        %v2792 = vadd.f32 %v2679, %v2791
        %2793 = vmatprep.mubr.bf16.mxu0 %v1801
        %2794 = vmatmul.mubr.bf16.gmra.mrb[0].mxu0 %v1800
        %v2795 = vpop.f32.mrb[0].mxu0
        %v2796 = vadd.f32 %v2683, %v2795
        %v2797 = vpop.f32.mrb[0].mxu0
        %v2798 = vadd.f32 %v2685, %v2797
        %v2799 = vpop.f32.mrb[0].mxu0
        %v2800 = vadd.f32 %v2687, %v2799
        %v2801 = vpop.f32.mrb[0].mxu0
        %v2802 = vadd.f32 %v2689, %v2801
        %2803 = vmatprep.mubr.bf16.mxu0 %v1809
        %2804 = vmatmul.mubr.bf16.gmra.mrb[0].mxu0 %v1808
        %v2805 = vpop.f32.mrb[0].mxu0
        %v2806 = vadd.f32 %v2693, %v2805
        %v2807 = vpop.f32.mrb[0].mxu0
        %v2808 = vadd.f32 %v2695, %v2807
        %v2809 = vpop.f32.mrb[0].mxu0
        %v2810 = vadd.f32 %v2697, %v2809
        %v2811 = vpop.f32.mrb[0].mxu0
        %v2812 = vadd.f32 %v2699, %v2811
        %2813 = vmatprep.mubr.bf16.mxu0 %v1817
        %2814 = vmatmul.mubr.bf16.gmra.mrb[0].mxu0 %v1816
        %v2815 = vpop.f32.mrb[0].mxu0
        %v2816 = vadd.f32 %v2703, %v2815
        %v2817 = vpop.f32.mrb[0].mxu0
        %v2818 = vadd.f32 %v2705, %v2817
        %v2819 = vpop.f32.mrb[0].mxu0
        %v2820 = vadd.f32 %v2707, %v2819
        %v2821 = vpop.f32.mrb[0].mxu0
        %v2822 = vadd.f32 %v2709, %v2821
        %2823 = vmatprep.mubr.bf16.mxu0 %v1825
        %2824 = vmatmul.mubr.bf16.gmra.mrb[0].mxu0 %v1824
        %v2825 = vpop.f32.mrb[0].mxu0
        %v2826 = vadd.f32 %v2713, %v2825
        %v2827 = vpop.f32.mrb[0].mxu0
        %v2828 = vadd.f32 %v2715, %v2827
        %v2829 = vpop.f32.mrb[0].mxu0
        %v2830 = vadd.f32 %v2717, %v2829
        %v2831 = vpop.f32.mrb[0].mxu0
        %v2832 = vadd.f32 %v2719, %v2831
        %2833 = vmatprep.mubr.bf16.mxu0 %v1833
        %2834 = vmatmul.mubr.bf16.gmra.mrb[0].mxu0 %v1832
        %v2835 = vpop.f32.mrb[0].mxu0
        %v2836 = vadd.f32 %v2723, %v2835
        %v2837 = vpop.f32.mrb[0].mxu0
        %v2838 = vadd.f32 %v2725, %v2837
        %v2839 = vpop.f32.mrb[0].mxu0
        %v2840 = vadd.f32 %v2727, %v2839
        %v2841 = vpop.f32.mrb[0].mxu0
        %v2842 = vadd.f32 %v2729, %v2841
        %2843 = vdwg.mxu0
        %2844 = vmatprep.subr.bf16.mxu0 %v2427
        %2845 = vmatpush1.bf16.msra.mxu0 %v2426
        %2846 = vmatprep.subr.bf16.mxu0 %v2429
        %2847 = vmatpush1.bf16.msra.mxu0 %v2428
        %2848 = vmatprep.subr.bf16.mxu0 %v2431
        %2849 = vmatpush1.bf16.msra.mxu0 %v2430
        %2850 = vmatprep.subr.bf16.mxu0 %v2433
        %2851 = vmatpush1.bf16.msra.mxu0 %v2432
        %2852 = vmatprep.subr.bf16.mxu0 %v2435
        %2853 = vmatpush1.bf16.msra.mxu0 %v2434
        %2854 = vmatprep.subr.bf16.mxu0 %v2437
        %2855 = vmatpush1.bf16.msra.mxu0 %v2436
        %2856 = vmatprep.subr.bf16.mxu0 %v2439
        %2857 = vmatpush1.bf16.msra.mxu0 %v2438
        %2858 = vmatprep.subr.bf16.mxu0 %v2441
        %2859 = vmatpush1.bf16.msra.mxu0 %v2440
        %2860 = vmatprep.subr.bf16.mxu0 %v2443
        %2861 = vmatpush1.bf16.msra.mxu0 %v2442
        %2862 = vmatprep.subr.bf16.mxu0 %v2445
        %2863 = vmatpush1.bf16.msra.mxu0 %v2444
        %2864 = vmatprep.subr.bf16.mxu0 %v2447
        %2865 = vmatpush1.bf16.msra.mxu0 %v2446
        %2866 = vmatprep.subr.bf16.mxu0 %v2449
        %2867 = vmatpush1.bf16.msra.mxu0 %v2448
        %2868 = vmatprep.subr.bf16.mxu0 %v2451
        %2869 = vmatpush1.bf16.msra.mxu0 %v2450
        %2870 = vmatprep.subr.bf16.mxu0 %v2453
        %2871 = vmatpush1.bf16.msra.mxu0 %v2452
        %2872 = vmatprep.subr.bf16.mxu0 %v2455
        %2873 = vmatpush1.bf16.msra.mxu0 %v2454
        %2874 = vmatprep.subr.bf16.mxu0 %v2457
        %2875 = vmatpush1.bf16.msra.mxu0 %v2456
        %2876 = vmatprep.mubr.bf16.mxu0 %v1779
        %2877 = vmatmul.mubr.bf16.gmra.mrb[0].mxu0 %v1778
        %v2878 = vpop.f32.mrb[0].mxu0
        %v2879 = vadd.f32 %v2766, %v2878
        %v2880 = vpop.f32.mrb[0].mxu0
        %v2881 = vadd.f32 %v2768, %v2880
        %v2882 = vpop.f32.mrb[0].mxu0
        %v2883 = vadd.f32 %v2770, %v2882
        %v2884 = vpop.f32.mrb[0].mxu0
        %v2885 = vadd.f32 %v2772, %v2884
        %2886 = vmatprep.mubr.bf16.mxu0 %v1787
        %2887 = vmatmul.mubr.bf16.gmra.mrb[0].mxu0 %v1786
        %v2888 = vpop.f32.mrb[0].mxu0
        %v2889 = vadd.f32 %v2776, %v2888
        %v2890 = vpop.f32.mrb[0].mxu0
        %v2891 = vadd.f32 %v2778, %v2890
        %v2892 = vpop.f32.mrb[0].mxu0
        %v2893 = vadd.f32 %v2780, %v2892
        %v2894 = vpop.f32.mrb[0].mxu0
        %v2895 = vadd.f32 %v2782, %v2894
        %2896 = vmatprep.mubr.bf16.mxu0 %v1795
        %2897 = vmatmul.mubr.bf16.gmra.mrb[0].mxu0 %v1794
        %v2898 = vpop.f32.mrb[0].mxu0
        %v2899 = vadd.f32 %v2786, %v2898
        %v2900 = vpop.f32.mrb[0].mxu0
        %v2901 = vadd.f32 %v2788, %v2900
        %v2902 = vpop.f32.mrb[0].mxu0
        %v2903 = vadd.f32 %v2790, %v2902
        %v2904 = vpop.f32.mrb[0].mxu0
        %v2905 = vadd.f32 %v2792, %v2904
        %2906 = vmatprep.mubr.bf16.mxu0 %v1803
        %2907 = vmatmul.mubr.bf16.gmra.mrb[0].mxu0 %v1802
        %v2908 = vpop.f32.mrb[0].mxu0
        %v2909 = vadd.f32 %v2796, %v2908
        %v2910 = vpop.f32.mrb[0].mxu0
        %v2911 = vadd.f32 %v2798, %v2910
        %v2912 = vpop.f32.mrb[0].mxu0
        %v2913 = vadd.f32 %v2800, %v2912
        %v2914 = vpop.f32.mrb[0].mxu0
        %v2915 = vadd.f32 %v2802, %v2914
        %2916 = vmatprep.mubr.bf16.mxu0 %v1811
        %2917 = vmatmul.mubr.bf16.gmra.mrb[0].mxu0 %v1810
        %v2918 = vpop.f32.mrb[0].mxu0
        %v2919 = vadd.f32 %v2806, %v2918
        %v2920 = vpop.f32.mrb[0].mxu0
        %v2921 = vadd.f32 %v2808, %v2920
        %v2922 = vpop.f32.mrb[0].mxu0
        %v2923 = vadd.f32 %v2810, %v2922
        %v2924 = vpop.f32.mrb[0].mxu0
        %v2925 = vadd.f32 %v2812, %v2924
        %2926 = vmatprep.mubr.bf16.mxu0 %v1819
        %2927 = vmatmul.mubr.bf16.gmra.mrb[0].mxu0 %v1818
        %v2928 = vpop.f32.mrb[0].mxu0
        %v2929 = vadd.f32 %v2816, %v2928
        %v2930 = vpop.f32.mrb[0].mxu0
        %v2931 = vadd.f32 %v2818, %v2930
        %v2932 = vpop.f32.mrb[0].mxu0
        %v2933 = vadd.f32 %v2820, %v2932
        %v2934 = vpop.f32.mrb[0].mxu0
        %v2935 = vadd.f32 %v2822, %v2934
        %2936 = vmatprep.mubr.bf16.mxu0 %v1827
        %2937 = vmatmul.mubr.bf16.gmra.mrb[0].mxu0 %v1826
        %v2938 = vpop.f32.mrb[0].mxu0
        %v2939 = vadd.f32 %v2826, %v2938
        %v2940 = vpop.f32.mrb[0].mxu0
        %v2941 = vadd.f32 %v2828, %v2940
        %v2942 = vpop.f32.mrb[0].mxu0
        %v2943 = vadd.f32 %v2830, %v2942
        %v2944 = vpop.f32.mrb[0].mxu0
        %v2945 = vadd.f32 %v2832, %v2944
        %2946 = vmatprep.mubr.bf16.mxu0 %v1835
        %2947 = vmatmul.mubr.bf16.gmra.mrb[0].mxu0 %v1834
        %v2948 = vpop.f32.mrb[0].mxu0
        %v2949 = vadd.f32 %v2836, %v2948
        %v2950 = vpop.f32.mrb[0].mxu0
        %v2951 = vadd.f32 %v2838, %v2950
        %v2952 = vpop.f32.mrb[0].mxu0
        %v2953 = vadd.f32 %v2840, %v2952
        %v2954 = vpop.f32.mrb[0].mxu0
        %v2955 = vadd.f32 %v2842, %v2954
        %2956 = vdwg.mxu0
        %2957 = vmatprep.subr.bf16.mxu0 %v2459
        %2958 = vmatpush1.bf16.msra.mxu0 %v2458
        %2959 = vmatprep.subr.bf16.mxu0 %v2461
        %2960 = vmatpush1.bf16.msra.mxu0 %v2460
        %2961 = vmatprep.subr.bf16.mxu0 %v2463
        %2962 = vmatpush1.bf16.msra.mxu0 %v2462
        %2963 = vmatprep.subr.bf16.mxu0 %v2465
        %2964 = vmatpush1.bf16.msra.mxu0 %v2464
        %2965 = vmatprep.subr.bf16.mxu0 %v2467
        %2966 = vmatpush1.bf16.msra.mxu0 %v2466
        %2967 = vmatprep.subr.bf16.mxu0 %v2469
        %2968 = vmatpush1.bf16.msra.mxu0 %v2468
        %2969 = vmatprep.subr.bf16.mxu0 %v2471
        %2970 = vmatpush1.bf16.msra.mxu0 %v2470
        %2971 = vmatprep.subr.bf16.mxu0 %v2473
        %2972 = vmatpush1.bf16.msra.mxu0 %v2472
        %2973 = vmatprep.subr.bf16.mxu0 %v2475
        %2974 = vmatpush1.bf16.msra.mxu0 %v2474
        %2975 = vmatprep.subr.bf16.mxu0 %v2477
        %2976 = vmatpush1.bf16.msra.mxu0 %v2476
        %2977 = vmatprep.subr.bf16.mxu0 %v2479
        %2978 = vmatpush1.bf16.msra.mxu0 %v2478
        %2979 = vmatprep.subr.bf16.mxu0 %v2481
        %2980 = vmatpush1.bf16.msra.mxu0 %v2480
        %2981 = vmatprep.subr.bf16.mxu0 %v2483
        %2982 = vmatpush1.bf16.msra.mxu0 %v2482
        %2983 = vmatprep.subr.bf16.mxu0 %v2485
        %2984 = vmatpush1.bf16.msra.mxu0 %v2484
        %2985 = vmatprep.subr.bf16.mxu0 %v2487
        %2986 = vmatpush1.bf16.msra.mxu0 %v2486
        %2987 = vmatprep.subr.bf16.mxu0 %v2489
        %2988 = vmatpush1.bf16.msra.mxu0 %v2488
        %2989 = vmatprep.mubr.bf16.mxu0 %v1781
        %2990 = vmatmul.mubr.bf16.gmra.mrb[0].mxu0 %v1780
        %v2991 = vpop.f32.mrb[0].mxu0
        %v2992 = vadd.f32 %v2879, %v2991
        %v2993 = vpop.f32.mrb[0].mxu0
        %v2994 = vadd.f32 %v2881, %v2993
        %v2995 = vpop.f32.mrb[0].mxu0
        %v2996 = vadd.f32 %v2883, %v2995
        %v2997 = vpop.f32.mrb[0].mxu0
        %v2998 = vadd.f32 %v2885, %v2997
        %2999 = vmatprep.mubr.bf16.mxu0 %v1789
        %3000 = vmatmul.mubr.bf16.gmra.mrb[0].mxu0 %v1788
        %v3001 = vpop.f32.mrb[0].mxu0
        %v3002 = vadd.f32 %v2889, %v3001
        %v3003 = vpop.f32.mrb[0].mxu0
        %v3004 = vadd.f32 %v2891, %v3003
        %v3005 = vpop.f32.mrb[0].mxu0
        %v3006 = vadd.f32 %v2893, %v3005
        %v3007 = vpop.f32.mrb[0].mxu0
        %v3008 = vadd.f32 %v2895, %v3007
        %3009 = vmatprep.mubr.bf16.mxu0 %v1797
        %3010 = vmatmul.mubr.bf16.gmra.mrb[0].mxu0 %v1796
        %v3011 = vpop.f32.mrb[0].mxu0
        %v3012 = vadd.f32 %v2899, %v3011
        %v3013 = vpop.f32.mrb[0].mxu0
        %v3014 = vadd.f32 %v2901, %v3013
        %v3015 = vpop.f32.mrb[0].mxu0
        %v3016 = vadd.f32 %v2903, %v3015
        %v3017 = vpop.f32.mrb[0].mxu0
        %v3018 = vadd.f32 %v2905, %v3017
        %3019 = vmatprep.mubr.bf16.mxu0 %v1805
        %3020 = vmatmul.mubr.bf16.gmra.mrb[0].mxu0 %v1804
        %v3021 = vpop.f32.mrb[0].mxu0
        %v3022 = vadd.f32 %v2909, %v3021
        %v3023 = vpop.f32.mrb[0].mxu0
        %v3024 = vadd.f32 %v2911, %v3023
        %v3025 = vpop.f32.mrb[0].mxu0
        %v3026 = vadd.f32 %v2913, %v3025
        %v3027 = vpop.f32.mrb[0].mxu0
        %v3028 = vadd.f32 %v2915, %v3027
        %3029 = vmatprep.mubr.bf16.mxu0 %v1813
        %3030 = vmatmul.mubr.bf16.gmra.mrb[0].mxu0 %v1812
        %v3031 = vpop.f32.mrb[0].mxu0
        %v3032 = vadd.f32 %v2919, %v3031
        %v3033 = vpop.f32.mrb[0].mxu0
        %v3034 = vadd.f32 %v2921, %v3033
        %v3035 = vpop.f32.mrb[0].mxu0
        %v3036 = vadd.f32 %v2923, %v3035
        %v3037 = vpop.f32.mrb[0].mxu0
        %v3038 = vadd.f32 %v2925, %v3037
        %3039 = vmatprep.mubr.bf16.mxu0 %v1821
        %3040 = vmatmul.mubr.bf16.gmra.mrb[0].mxu0 %v1820
        %v3041 = vpop.f32.mrb[0].mxu0
        %v3042 = vadd.f32 %v2929, %v3041
        %v3043 = vpop.f32.mrb[0].mxu0
        %v3044 = vadd.f32 %v2931, %v3043
        %v3045 = vpop.f32.mrb[0].mxu0
        %v3046 = vadd.f32 %v2933, %v3045
        %v3047 = vpop.f32.mrb[0].mxu0
        %v3048 = vadd.f32 %v2935, %v3047
        %3049 = vmatprep.mubr.bf16.mxu0 %v1829
        %3050 = vmatmul.mubr.bf16.gmra.mrb[0].mxu0 %v1828
        %v3051 = vpop.f32.mrb[0].mxu0
        %v3052 = vadd.f32 %v2939, %v3051
        %v3053 = vpop.f32.mrb[0].mxu0
        %v3054 = vadd.f32 %v2941, %v3053
        %v3055 = vpop.f32.mrb[0].mxu0
        %v3056 = vadd.f32 %v2943, %v3055
        %v3057 = vpop.f32.mrb[0].mxu0
        %v3058 = vadd.f32 %v2945, %v3057
        %3059 = vmatprep.mubr.bf16.mxu0 %v1837
        %3060 = vmatmul.mubr.bf16.gmra.mrb[0].mxu0 %v1836
        %v3061 = vpop.f32.mrb[0].mxu0
        %v3062 = vadd.f32 %v2949, %v3061
        %v3063 = vpop.f32.mrb[0].mxu0
        %v3064 = vadd.f32 %v2951, %v3063
        %v3065 = vpop.f32.mrb[0].mxu0
        %v3066 = vadd.f32 %v2953, %v3065
        %v3067 = vpop.f32.mrb[0].mxu0
        %v3068 = vadd.f32 %v2955, %v3067
        %3069 = vdwg.mxu0
        %3070 = vst [vmem:[%s285] sm:$0xff] %v2992
        %3071 = vst [vmem:[%s285 + $0x8] sm:$0xff] %v2994
        %3072 = vst [vmem:[%s285 + $0x10] sm:$0xff] %v2996
        %3073 = vst [vmem:[%s285 + $0x18] sm:$0xff] %v2998
        %3074 = vst [vmem:[%s285 + $0x20] sm:$0xff] %v3002
        %3075 = vst [vmem:[%s285 + $0x28] sm:$0xff] %v3004
        %3076 = vst [vmem:[%s285 + $0x30] sm:$0xff] %v3006
        %3077 = vst [vmem:[%s285 + $0x38] sm:$0xff] %v3008
        %3078 = vst [vmem:[%s285 + $0x40] sm:$0xff] %v3012
        %3079 = vst [vmem:[%s285 + $0x48] sm:$0xff] %v3014
        %3080 = vst [vmem:[%s285 + $0x50] sm:$0xff] %v3016
        %3081 = vst [vmem:[%s285 + $0x58] sm:$0xff] %v3018
        %3082 = vst [vmem:[%s285 + $0x60] sm:$0xff] %v3022
        %3083 = vst [vmem:[%s285 + $0x68] sm:$0xff] %v3024
        %3084 = vst [vmem:[%s285 + $0x70] sm:$0xff] %v3026
        %3085 = vst [vmem:[%s285 + $0x78] sm:$0xff] %v3028
        %3086 = vst [vmem:[%s285 + $0x80] sm:$0xff] %v3032
        %3087 = vst [vmem:[%s285 + $0x88] sm:$0xff] %v3034
        %3088 = vst [vmem:[%s285 + $0x90] sm:$0xff] %v3036
        %3089 = vst [vmem:[%s285 + $0x98] sm:$0xff] %v3038
        %3090 = vst [vmem:[%s285 + $0xa0] sm:$0xff] %v3042
        %3091 = vst [vmem:[%s285 + $0xa8] sm:$0xff] %v3044
        %3092 = vst [vmem:[%s285 + $0xb0] sm:$0xff] %v3046
        %3093 = vst [vmem:[%s285 + $0xb8] sm:$0xff] %v3048
        %3094 = vst [vmem:[%s285 + $0xc0] sm:$0xff] %v3052
        %3095 = vst [vmem:[%s285 + $0xc8] sm:$0xff] %v3054
        %3096 = vst [vmem:[%s285 + $0xd0] sm:$0xff] %v3056
        %3097 = vst [vmem:[%s285 + $0xd8] sm:$0xff] %v3058
        %3098 = vst [vmem:[%s285 + $0xe0] sm:$0xff] %v3062
        %3099 = vst [vmem:[%s285 + $0xe8] sm:$0xff] %v3064
        %3100 = vst [vmem:[%s285 + $0xf0] sm:$0xff] %v3066
        %3101 = vst [vmem:[%s285 + $0xf8] sm:$0xff] %v3068
        %s3102 = sand.u32 %s142, 1
        %s3103 = scalar_lea.sflag [#allocation4], %s3102
        %s3104 = sand.u32 %s142, 1
        %s3105 = smul.addr %s3104, 256
        %s3106 = scalar_lea.vmem [#allocation10], %s3105
        // Predicated region
        $region57: #{tpu_custom_call.1} parent=39 // pred_check
          %p3107 = pneg %p152
        $region58: #{tpu_custom_call.1} parent=39 // pred_check_branch
          %3109 = sbr.rel (%p3107) target = $region60
        $region59: #{tpu_custom_call.1} parent=39 // pred_region
          %s3110 = smul.u32 16, %s24
          %s3112 = ssub.s32 4096, 4096
          %3113 = vsyncadd %s3103, %s3112
          %s3114 = smul.addr %s3110, 2
          %s3115 = smul.addr %s3114, 128
          %s3116 = scalar_lea.hbm %s5, %s3115
          %s3117 = sshll.u32 %s3106, 4
          %s3118 = int_to_ptr.vmem [resolvable:$true] %s3117
          %3123 = dma.vmem_to_hbm [thread:$0]  %s3118, 4096, %s3116, %s3103, 256, 256, 16
        $region60: #{tpu_custom_call.1} parent=39 // pred_fallthru
          _
      $region40: #{tpu_custom_call.1} parent=5 // pred_fallthru
        _
      %p3124 = scmp.le.s32.totalorder 2, %s19
      // Predicated region
      $region61: #{tpu_custom_call.1} parent=5 // pred_check
        %p3125 = pneg %p3124
      $region62: #{tpu_custom_call.1} parent=5 // pred_check_branch
        %3127 = sbr.rel (%p3125) target = $region64
      $region63: #{tpu_custom_call.1} parent=5 // pred_region
        %s3128 = ssub.s32 %s19, 2
        // Predicated region
        $region65: #{tpu_custom_call.1} parent=63 // pred_check
          %p3129 = pneg %p158
        $region66: #{tpu_custom_call.1} parent=63 // pred_check_branch
          %3131 = sbr.rel (%p3129) target = $region68
        $region67: #{tpu_custom_call.1} parent=63 // pred_region
          %s3132 = sand.u32 %s143, 1
          %s3133 = scalar_lea.sflag [#allocation4], %s3132
          %s3134 = sand.u32 %s143, 1
          %s3135 = smul.addr %s3134, 256
          %s3136 = scalar_lea.vmem [#allocation10], %s3135
          %3137 = dma.done %s3133, 4096
        $region68: #{tpu_custom_call.1} parent=63 // pred_fallthru
          _
      $region64: #{tpu_custom_call.1} parent=5 // pred_fallthru
        _
    $region6: #{tpu_custom_call.1} parent=1 // loop_footer
      %s23 = sadd.s32 1, %s19
    $region7: #{tpu_custom_call.1} parent=1 // loop_footer_branch
      %18 = sbr.rel target = $region3
    $region8: #{tpu_custom_call.1} parent=1 // loop_exit
      _
    %3138 = vsyncpa [#allocation3], 1
    %s3139 = scalar_lea.sflag [#allocation3], 1
    %3140 = vsyncpa %s3139, 1
    %3141 = vsyncpa [#allocation6], 1
    %3142 = vsyncpa [#allocation9], 1
    %3143 = vsyncpa [#allocation4], 1
    %s3144 = scalar_lea.sflag [#allocation4], 1
    %3145 = vsyncpa %s3144, 1

</llo_original>
